<compile_context>
chip_gen: v6e
topology: v6e:2x2x1
jax: 0.10.0
libtpu: 0.0.40
codegen_flags: <defaults>
</compile_context>

<pallas_src>
import jax
import jax.numpy as jnp
from jax.experimental import pallas as pl
from jax.experimental.pallas import tpu as pltpu

# QoTEstimator2_hierarchical.Net layer sizes (in, out)
LAYER_DIMS = [(12, 100), (100, 100), (100, 250), (250, 250), (250, 100), (100, 30), (30, 1)]
LANE = 128        # lane width: hidden feature dims are padded to a multiple of this
TB_DEFAULT = 512  # default batch tile (rows per grid step)


def _round_up(x, m):
    return ((x + m - 1) // m) * m


def mlp_kernel(x_ref,
               w1_ref, b1_ref, w2_ref, b2_ref, w3_ref, b3_ref,
               w4_ref, b4_ref, w5_ref, b5_ref, w6_ref, b6_ref,
               w7_ref, b7_ref,
               o_ref):
    # x tile: (tb, 12) f32 -- no padded lanes are ever read from HBM.
    def dense(h_bf16, w_ref, b_ref):
        # bf16 x bf16 on the MXU with f32 accumulation; bias add + ReLU on the VPU in f32.
        y = jnp.dot(h_bf16, w_ref[...], preferred_element_type=jnp.float32) + b_ref[...]
        return jnp.maximum(y, 0.0)

    h = x_ref[...].astype(jnp.bfloat16)                    # (tb, 12)
    # Downcast to bf16 right after each ReLU so inter-layer intermediates spill as bf16.
    h = dense(h, w1_ref, b1_ref).astype(jnp.bfloat16)      # (tb, 128)
    h = dense(h, w2_ref, b2_ref).astype(jnp.bfloat16)      # (tb, 128)
    h = dense(h, w3_ref, b3_ref).astype(jnp.bfloat16)      # (tb, 256)
    h = dense(h, w4_ref, b4_ref).astype(jnp.bfloat16)      # (tb, 256)
    h = dense(h, w5_ref, b5_ref).astype(jnp.bfloat16)      # (tb, 128)
    h6 = dense(h, w6_ref, b6_ref)                          # (tb, 128) f32 (padded lanes are exact zeros)

    # Lane-repack the logits: f32 XLU transpose (tb,128)->(128,tb), then a (1,128)x(128,tb) matmul
    # puts the batch on the lane axis, so the output block is a dense (1, tb) f32 row.
    h6_t = jnp.transpose(h6).astype(jnp.bfloat16)          # (128, tb)
    logit = jnp.dot(w7_ref[...], h6_t,
                    preferred_element_type=jnp.float32)    # (1, tb)
    logit = logit + b7_ref[0, 0]                           # scalar bias from SMEM
    o_ref[0] = logit                                       # o_ref: (1, 1, tb)


def init_params(key):
    """Deterministic init matching torch.nn.Linear default U(-1/sqrt(in), 1/sqrt(in)).
    Weights are built pre-transposed as (in, out); biases as (1, out)."""
    params = []
    for (fan_in, fan_out) in LAYER_DIMS:
        key, kw, kb = jax.random.split(key, 3)
        bound = float(fan_in) ** -0.5
        w = jax.random.uniform(kw, (fan_in, fan_out), jnp.float32, -bound, bound)
        b = jax.random.uniform(kb, (1, fan_out), jnp.float32, -bound, bound)
        params.append((w, b))
    return params


def prepare_params(params):
    """Pack parameters for the kernel.
    Layers 1-6: zero-pad (in,out)/(1,out) to lane-aligned shapes, weights in bf16.  Layer 1 keeps its
    true in-dim (12) so x can be read unpadded.  Layer 7 is stored as a (1, 128) bf16 row (out, in_pad)
    plus a (1, 1) f32 scalar bias (lives in SMEM inside the kernel)."""
    prepared = []
    for li, (w, b) in enumerate(params[:-1]):
        fi, fo = w.shape
        fi_p = fi if li == 0 else _round_up(fi, LANE)
        fo_p = _round_up(fo, LANE)
        w_p = jnp.zeros((fi_p, fo_p), jnp.bfloat16).at[:fi, :fo].set(w.astype(jnp.bfloat16))
        b_p = jnp.zeros((1, fo_p), jnp.float32).at[:, :fo].set(b)
        prepared.append((w_p, b_p))
    w7, b7 = params[-1]                                    # (30, 1), (1, 1)
    fi = w7.shape[0]
    w7_row = jnp.zeros((1, _round_up(fi, LANE)), jnp.bfloat16).at[:, :fi].set(
        w7.T.astype(jnp.bfloat16))
    prepared.append((w7_row, b7.astype(jnp.float32)))
    return prepared


def net_forward(x, prepared, *, tb=TB_DEFAULT):
    """x: (B, 12) float32 -> (B, 1) float32 logits (Net.forward)."""
    B, F = x.shape
    assert F == LAYER_DIMS[0][0]
    # Batch tile: big enough to amortize per-grid-step overhead and fill the 256-wide MXU on v6e/v7x,
    # clamped so tiny batches are not over-padded; always a multiple of 128 (lane-dense output row).
    tb = max(128, min(tb, _round_up(B, 128)))
    B_pad = _round_up(B, tb)
    num_tiles = B_pad // tb
    if B_pad != B:
        x = jnp.zeros((B_pad, F), x.dtype).at[:B].set(x)   # ragged last tile -> zero rows (discarded)

    (w1, b1), (w2, b2), (w3, b3), (w4, b4), (w5, b5), (w6, b6), (w7, b7) = prepared

    def const_spec(a):
        # Constant index map -> block stays VMEM-resident across all batch tiles.
        return pl.BlockSpec(a.shape, lambda i: (0, 0))

    in_specs = [pl.BlockSpec((tb, F), lambda i: (i, 0))]   # (tb, 12): last dim == full array dim
    flat = []
    for (w, b) in ((w1, b1), (w2, b2), (w3, b3), (w4, b4), (w5, b5), (w6, b6)):
        flat += [w, b]
        in_specs += [const_spec(w), const_spec(b)]
    flat += [w7, b7]
    in_specs += [const_spec(w7),
                 pl.BlockSpec(memory_space=pltpu.MemorySpace.SMEM)]   # scalar bias -> SMEM

    flops = 2 * B_pad * sum(di * do for di, do in LAYER_DIMS)
    bytes_accessed = (x.size * x.dtype.itemsize
                      + sum(a.size * a.dtype.itemsize for a in flat)
                      + B_pad * 4)

    out = pl.pallas_call(
        mlp_kernel,
        out_shape=jax.ShapeDtypeStruct((num_tiles, 1, tb), jnp.float32),
        grid_spec=pl.GridSpec(
            grid=(num_tiles,),
            in_specs=in_specs,
            out_specs=pl.BlockSpec((1, 1, tb), lambda i: (i, 0, 0)),
        ),
        compiler_params=pltpu.CompilerParams(
            dimension_semantics=("parallel",),             # shards batch tiles across TCs on v7x
        ),
        cost_estimate=pl.CostEstimate(flops=flops, transcendentals=0,
                                      bytes_accessed=bytes_accessed),
    )(x, *flat)
    return out.reshape(B_pad, 1)[:B]


def reference_forward(x, prepared):
    """Pure-JAX reference mirroring the kernel numerics (bf16 weights & inter-layer activations,
    f32 accumulation).  Note: this validates the kernel against its own bf16 quantization; deviation
    from the original f32 torch Net is ~1e-2 relative (acceptable for inference)."""
    h = x.astype(jnp.bfloat16)
    for (w, b) in prepared[:-1]:
        y = jnp.dot(h, w, preferred_element_type=jnp.float32) + b
        h = jnp.maximum(y, 0.0).astype(jnp.bfloat16)
    w7, b7 = prepared[-1]
    return jnp.dot(h, jnp.transpose(w7), preferred_element_type=jnp.float32) + b7


if __name__ == "__main__":
    key = jax.random.PRNGKey(0)
    key, kx = jax.random.split(key)
    B = 8
    x = jax.random.normal(kx, (B, 12), jnp.float32)
    params = init_params(key)
    prepared = prepare_params(params)

    out = jax.block_until_ready(net_forward(x, prepared))
    ref = jax.block_until_ready(reference_forward(x, prepared))

    assert out.shape == (B, 1), out.shape
    assert jnp.allclose(out, ref, atol=1e-2, rtol=1e-2), (out, ref)
    print("KERNEL_OK")
</pallas_src>

<mosaic_0001>
module attributes {stable_mosaic.version = 11 : i64} {
  func.func @mlp_kernel(%arg0: i32, %arg1: memref<128x12xf32, #tpu.memory_space<vmem>>, %arg2: memref<12x128xbf16, #tpu.memory_space<vmem>>, %arg3: memref<1x128xf32, #tpu.memory_space<vmem>>, %arg4: memref<128x128xbf16, #tpu.memory_space<vmem>>, %arg5: memref<1x128xf32, #tpu.memory_space<vmem>>, %arg6: memref<128x256xbf16, #tpu.memory_space<vmem>>, %arg7: memref<1x256xf32, #tpu.memory_space<vmem>>, %arg8: memref<256x256xbf16, #tpu.memory_space<vmem>>, %arg9: memref<1x256xf32, #tpu.memory_space<vmem>>, %arg10: memref<256x128xbf16, #tpu.memory_space<vmem>>, %arg11: memref<1x128xf32, #tpu.memory_space<vmem>>, %arg12: memref<128x128xbf16, #tpu.memory_space<vmem>>, %arg13: memref<1x128xf32, #tpu.memory_space<vmem>>, %arg14: memref<1x128xbf16, #tpu.memory_space<vmem>>, %arg15: memref<1x1xf32, #tpu.memory_space<smem>>, %arg16: memref<1x1x128xf32, #tpu.memory_space<vmem>>) attributes {dimension_semantics = [#tpu.dimension_semantics<parallel>], iteration_bounds = array<i64: 1>, scalar_prefetch = 0 : i64, scratch_operands = 0 : i64, tpu.core_type = #tpu.core_type<tc>, window_params = [{transform_indices = @transform_0, window_bounds = array<i64: 128, 12>}, {pipeline_mode = #tpu.pipeline_mode<synchronous>, transform_indices = @transform_1, window_bounds = array<i64: 12, 128>}, {pipeline_mode = #tpu.pipeline_mode<synchronous>, transform_indices = @transform_2, window_bounds = array<i64: 1, 128>}, {pipeline_mode = #tpu.pipeline_mode<synchronous>, transform_indices = @transform_3, window_bounds = array<i64: 128, 128>}, {pipeline_mode = #tpu.pipeline_mode<synchronous>, transform_indices = @transform_4, window_bounds = array<i64: 1, 128>}, {pipeline_mode = #tpu.pipeline_mode<synchronous>, transform_indices = @transform_5, window_bounds = array<i64: 128, 256>}, {pipeline_mode = #tpu.pipeline_mode<synchronous>, transform_indices = @transform_6, window_bounds = array<i64: 1, 256>}, {pipeline_mode = #tpu.pipeline_mode<synchronous>, transform_indices = @transform_7, window_bounds = array<i64: 256, 256>}, {pipeline_mode = #tpu.pipeline_mode<synchronous>, transform_indices = @transform_8, window_bounds = array<i64: 1, 256>}, {pipeline_mode = #tpu.pipeline_mode<synchronous>, transform_indices = @transform_9, window_bounds = array<i64: 256, 128>}, {pipeline_mode = #tpu.pipeline_mode<synchronous>, transform_indices = @transform_10, window_bounds = array<i64: 1, 128>}, {pipeline_mode = #tpu.pipeline_mode<synchronous>, transform_indices = @transform_11, window_bounds = array<i64: 128, 128>}, {pipeline_mode = #tpu.pipeline_mode<synchronous>, transform_indices = @transform_12, window_bounds = array<i64: 1, 128>}, {pipeline_mode = #tpu.pipeline_mode<synchronous>, transform_indices = @transform_13, window_bounds = array<i64: 1, 128>}, {transform_indices = @transform_14, window_bounds = array<i64: 1, 1>}, {transform_indices = @transform_15, window_bounds = array<i64: 1, 1, 128>}]} {
    %c0 = arith.constant 0 : index
    %c0_0 = arith.constant 0 : index
    %0 = vector.load %arg1[%c0, %c0_0] : memref<128x12xf32, #tpu.memory_space<vmem>>, vector<128x12xf32>
    %1 = arith.truncf %0 : vector<128x12xf32> to vector<128x12xbf16>
    %c0_1 = arith.constant 0 : index
    %c0_2 = arith.constant 0 : index
    %2 = vector.load %arg2[%c0_1, %c0_2] : memref<12x128xbf16, #tpu.memory_space<vmem>>, vector<12x128xbf16>
    %cst = arith.constant dense<0.000000e+00> : vector<128x128xf32>
    %3 = tpu.matmul %1, %2, %cst {dimension_numbers = #tpu.dot_dimension_numbers<[1], [0], [0], [1], [0, 0, 1, 1], [], []>} : vector<128x12xbf16>, vector<12x128xbf16>, vector<128x128xf32> -> vector<128x128xf32>
    %c0_3 = arith.constant 0 : index
    %c0_4 = arith.constant 0 : index
    %4 = vector.load %arg3[%c0_3, %c0_4] : memref<1x128xf32, #tpu.memory_space<vmem>>, vector<1x128xf32>
    %5 = vector.broadcast %4 : vector<1x128xf32> to vector<128x128xf32>
    %6 = arith.addf %3, %5 : vector<128x128xf32>
    %cst_5 = arith.constant 0.000000e+00 : f32
    %7 = vector.broadcast %cst_5 : f32 to vector<128x128xf32>
    %8 = arith.maximumf %6, %7 : vector<128x128xf32>
    %9 = arith.truncf %8 : vector<128x128xf32> to vector<128x128xbf16>
    %c0_6 = arith.constant 0 : index
    %c0_7 = arith.constant 0 : index
    %10 = vector.load %arg4[%c0_6, %c0_7] : memref<128x128xbf16, #tpu.memory_space<vmem>>, vector<128x128xbf16>
    %cst_8 = arith.constant dense<0.000000e+00> : vector<128x128xf32>
    %11 = tpu.matmul %9, %10, %cst_8 {dimension_numbers = #tpu.dot_dimension_numbers<[1], [0], [0], [1], [0, 0, 1, 1], [], []>} : vector<128x128xbf16>, vector<128x128xbf16>, vector<128x128xf32> -> vector<128x128xf32>
    %c0_9 = arith.constant 0 : index
    %c0_10 = arith.constant 0 : index
    %12 = vector.load %arg5[%c0_9, %c0_10] : memref<1x128xf32, #tpu.memory_space<vmem>>, vector<1x128xf32>
    %13 = vector.broadcast %12 : vector<1x128xf32> to vector<128x128xf32>
    %14 = arith.addf %11, %13 : vector<128x128xf32>
    %cst_11 = arith.constant 0.000000e+00 : f32
    %15 = vector.broadcast %cst_11 : f32 to vector<128x128xf32>
    %16 = arith.maximumf %14, %15 : vector<128x128xf32>
    %17 = arith.truncf %16 : vector<128x128xf32> to vector<128x128xbf16>
    %c0_12 = arith.constant 0 : index
    %c0_13 = arith.constant 0 : index
    %18 = vector.load %arg6[%c0_12, %c0_13] : memref<128x256xbf16, #tpu.memory_space<vmem>>, vector<128x256xbf16>
    %cst_14 = arith.constant dense<0.000000e+00> : vector<128x256xf32>
    %19 = tpu.matmul %17, %18, %cst_14 {dimension_numbers = #tpu.dot_dimension_numbers<[1], [0], [0], [1], [0, 0, 1, 1], [], []>} : vector<128x128xbf16>, vector<128x256xbf16>, vector<128x256xf32> -> vector<128x256xf32>
    %c0_15 = arith.constant 0 : index
    %c0_16 = arith.constant 0 : index
    %20 = vector.load %arg7[%c0_15, %c0_16] : memref<1x256xf32, #tpu.memory_space<vmem>>, vector<1x256xf32>
    %21 = vector.broadcast %20 : vector<1x256xf32> to vector<128x256xf32>
    %22 = arith.addf %19, %21 : vector<128x256xf32>
    %cst_17 = arith.constant 0.000000e+00 : f32
    %23 = vector.broadcast %cst_17 : f32 to vector<128x256xf32>
    %24 = arith.maximumf %22, %23 : vector<128x256xf32>
    %25 = arith.truncf %24 : vector<128x256xf32> to vector<128x256xbf16>
    %c0_18 = arith.constant 0 : index
    %c0_19 = arith.constant 0 : index
    %26 = vector.load %arg8[%c0_18, %c0_19] : memref<256x256xbf16, #tpu.memory_space<vmem>>, vector<256x256xbf16>
    %cst_20 = arith.constant dense<0.000000e+00> : vector<128x256xf32>
    %27 = tpu.matmul %25, %26, %cst_20 {dimension_numbers = #tpu.dot_dimension_numbers<[1], [0], [0], [1], [0, 0, 1, 1], [], []>} : vector<128x256xbf16>, vector<256x256xbf16>, vector<128x256xf32> -> vector<128x256xf32>
    %c0_21 = arith.constant 0 : index
    %c0_22 = arith.constant 0 : index
    %28 = vector.load %arg9[%c0_21, %c0_22] : memref<1x256xf32, #tpu.memory_space<vmem>>, vector<1x256xf32>
    %29 = vector.broadcast %28 : vector<1x256xf32> to vector<128x256xf32>
    %30 = arith.addf %27, %29 : vector<128x256xf32>
    %cst_23 = arith.constant 0.000000e+00 : f32
    %31 = vector.broadcast %cst_23 : f32 to vector<128x256xf32>
    %32 = arith.maximumf %30, %31 : vector<128x256xf32>
    %33 = arith.truncf %32 : vector<128x256xf32> to vector<128x256xbf16>
    %c0_24 = arith.constant 0 : index
    %c0_25 = arith.constant 0 : index
    %34 = vector.load %arg10[%c0_24, %c0_25] : memref<256x128xbf16, #tpu.memory_space<vmem>>, vector<256x128xbf16>
    %cst_26 = arith.constant dense<0.000000e+00> : vector<128x128xf32>
    %35 = tpu.matmul %33, %34, %cst_26 {dimension_numbers = #tpu.dot_dimension_numbers<[1], [0], [0], [1], [0, 0, 1, 1], [], []>} : vector<128x256xbf16>, vector<256x128xbf16>, vector<128x128xf32> -> vector<128x128xf32>
    %c0_27 = arith.constant 0 : index
    %c0_28 = arith.constant 0 : index
    %36 = vector.load %arg11[%c0_27, %c0_28] : memref<1x128xf32, #tpu.memory_space<vmem>>, vector<1x128xf32>
    %37 = vector.broadcast %36 : vector<1x128xf32> to vector<128x128xf32>
    %38 = arith.addf %35, %37 : vector<128x128xf32>
    %cst_29 = arith.constant 0.000000e+00 : f32
    %39 = vector.broadcast %cst_29 : f32 to vector<128x128xf32>
    %40 = arith.maximumf %38, %39 : vector<128x128xf32>
    %41 = arith.truncf %40 : vector<128x128xf32> to vector<128x128xbf16>
    %c0_30 = arith.constant 0 : index
    %c0_31 = arith.constant 0 : index
    %42 = vector.load %arg12[%c0_30, %c0_31] : memref<128x128xbf16, #tpu.memory_space<vmem>>, vector<128x128xbf16>
    %cst_32 = arith.constant dense<0.000000e+00> : vector<128x128xf32>
    %43 = tpu.matmul %41, %42, %cst_32 {dimension_numbers = #tpu.dot_dimension_numbers<[1], [0], [0], [1], [0, 0, 1, 1], [], []>} : vector<128x128xbf16>, vector<128x128xbf16>, vector<128x128xf32> -> vector<128x128xf32>
    %c0_33 = arith.constant 0 : index
    %c0_34 = arith.constant 0 : index
    %44 = vector.load %arg13[%c0_33, %c0_34] : memref<1x128xf32, #tpu.memory_space<vmem>>, vector<1x128xf32>
    %45 = vector.broadcast %44 : vector<1x128xf32> to vector<128x128xf32>
    %46 = arith.addf %43, %45 : vector<128x128xf32>
    %cst_35 = arith.constant 0.000000e+00 : f32
    %47 = vector.broadcast %cst_35 : f32 to vector<128x128xf32>
    %48 = arith.maximumf %46, %47 : vector<128x128xf32>
    %49 = tpu.transpose %48, [1, 0] : vector<128x128xf32> -> vector<128x128xf32>
    %50 = arith.truncf %49 : vector<128x128xf32> to vector<128x128xbf16>
    %c0_36 = arith.constant 0 : index
    %c0_37 = arith.constant 0 : index
    %51 = vector.load %arg14[%c0_36, %c0_37] : memref<1x128xbf16, #tpu.memory_space<vmem>>, vector<1x128xbf16>
    %cst_38 = arith.constant dense<0.000000e+00> : vector<1x128xf32>
    %52 = tpu.matmul %51, %50, %cst_38 {dimension_numbers = #tpu.dot_dimension_numbers<[1], [0], [0], [1], [0, 0, 1, 1], [], []>} : vector<1x128xbf16>, vector<128x128xbf16>, vector<1x128xf32> -> vector<1x128xf32>
    %c0_39 = arith.constant 0 : index
    %c0_40 = arith.constant 0 : index
    %53 = memref.load %arg15[%c0_39, %c0_40] : memref<1x1xf32, #tpu.memory_space<smem>>
    %54 = vector.broadcast %53 : f32 to vector<1x128xf32>
    %55 = arith.addf %52, %54 : vector<1x128xf32>
    %c0_41 = arith.constant 0 : index
    %c0_42 = arith.constant 0 : index
    %c0_43 = arith.constant 0 : index
    %56 = vector.load %arg16[%c0_41, %c0_42, %c0_43] : memref<1x1x128xf32, #tpu.memory_space<vmem>>, vector<1x1x128xf32>
    %57 = vector.shape_cast %56 : vector<1x1x128xf32> to vector<1x128xf32>
    %58 = vector.shape_cast %55 : vector<1x128xf32> to vector<1x1x128xf32>
    tpu.vector_store %arg16[%c0_41, %c0_42, %c0_43], %58 {strides = array<i32>} : memref<1x1x128xf32, #tpu.memory_space<vmem>>, vector<1x1x128xf32>,
    return
  }
  func.func @transform_0(%arg0: i32) -> (i32, i32) {
    %c0_i32 = arith.constant 0 : i32
    %c0_i32_0 = arith.constant 0 : i32
    return %arg0, %c0_i32 : i32, i32
  }
  func.func @transform_1(%arg0: i32) -> (i32, i32) {
    %c0_i32 = arith.constant 0 : i32
    %c0_i32_0 = arith.constant 0 : i32
    %c0_i32_1 = arith.constant 0 : i32
    return %c0_i32, %c0_i32_0 : i32, i32
  }
  func.func @transform_2(%arg0: i32) -> (i32, i32) {
    %c0_i32 = arith.constant 0 : i32
    %c0_i32_0 = arith.constant 0 : i32
    %c0_i32_1 = arith.constant 0 : i32
    return %c0_i32, %c0_i32_0 : i32, i32
  }
  func.func @transform_3(%arg0: i32) -> (i32, i32) {
    %c0_i32 = arith.constant 0 : i32
    %c0_i32_0 = arith.constant 0 : i32
    %c0_i32_1 = arith.constant 0 : i32
    return %c0_i32, %c0_i32_0 : i32, i32
  }
  func.func @transform_4(%arg0: i32) -> (i32, i32) {
    %c0_i32 = arith.constant 0 : i32
    %c0_i32_0 = arith.constant 0 : i32
    %c0_i32_1 = arith.constant 0 : i32
    return %c0_i32, %c0_i32_0 : i32, i32
  }
  func.func @transform_5(%arg0: i32) -> (i32, i32) {
    %c0_i32 = arith.constant 0 : i32
    %c0_i32_0 = arith.constant 0 : i32
    %c0_i32_1 = arith.constant 0 : i32
    return %c0_i32, %c0_i32_0 : i32, i32
  }
  func.func @transform_6(%arg0: i32) -> (i32, i32) {
    %c0_i32 = arith.constant 0 : i32
    %c0_i32_0 = arith.constant 0 : i32
    %c0_i32_1 = arith.constant 0 : i32
    return %c0_i32, %c0_i32_0 : i32, i32
  }
  func.func @transform_7(%arg0: i32) -> (i32, i32) {
    %c0_i32 = arith.constant 0 : i32
    %c0_i32_0 = arith.constant 0 : i32
    %c0_i32_1 = arith.constant 0 : i32
    return %c0_i32, %c0_i32_0 : i32, i32
  }
  func.func @transform_8(%arg0: i32) -> (i32, i32) {
    %c0_i32 = arith.constant 0 : i32
    %c0_i32_0 = arith.constant 0 : i32
    %c0_i32_1 = arith.constant 0 : i32
    return %c0_i32, %c0_i32_0 : i32, i32
  }
  func.func @transform_9(%arg0: i32) -> (i32, i32) {
    %c0_i32 = arith.constant 0 : i32
    %c0_i32_0 = arith.constant 0 : i32
    %c0_i32_1 = arith.constant 0 : i32
    return %c0_i32, %c0_i32_0 : i32, i32
  }
  func.func @transform_10(%arg0: i32) -> (i32, i32) {
    %c0_i32 = arith.constant 0 : i32
    %c0_i32_0 = arith.constant 0 : i32
    %c0_i32_1 = arith.constant 0 : i32
    return %c0_i32, %c0_i32_0 : i32, i32
  }
  func.func @transform_11(%arg0: i32) -> (i32, i32) {
    %c0_i32 = arith.constant 0 : i32
    %c0_i32_0 = arith.constant 0 : i32
    %c0_i32_1 = arith.constant 0 : i32
    return %c0_i32, %c0_i32_0 : i32, i32
  }
  func.func @transform_12(%arg0: i32) -> (i32, i32) {
    %c0_i32 = arith.constant 0 : i32
    %c0_i32_0 = arith.constant 0 : i32
    %c0_i32_1 = arith.constant 0 : i32
    return %c0_i32, %c0_i32_0 : i32, i32
  }
  func.func @transform_13(%arg0: i32) -> (i32, i32) {
    %c0_i32 = arith.constant 0 : i32
    %c0_i32_0 = arith.constant 0 : i32
    %c0_i32_1 = arith.constant 0 : i32
    return %c0_i32, %c0_i32_0 : i32, i32
  }
  func.func @transform_14(%arg0: i32) -> (i32, i32) {
    %c0_i32 = arith.constant 0 : i32
    %c0_i32_0 = arith.constant 0 : i32
    %c0_i32_1 = arith.constant 0 : i32
    return %c0_i32, %c0_i32_0 : i32, i32
  }
  func.func @transform_15(%arg0: i32) -> (i32, i32, i32) {
    %c0_i32 = arith.constant 0 : i32
    %c0_i32_0 = arith.constant 0 : i32
    %c0_i32_1 = arith.constant 0 : i32
    return %arg0, %c0_i32, %c0_i32_0 : i32, i32, i32
  }
}

</mosaic_0001>

<llo_original>
// kernel: tpu_custom_call.1
$region0: #{tpu_custom_call.1}
  #allocation0 [shape = 'u32[]', space=smem, size = 0x4, offset = 0x4, fixed_abs, tag = 'smem constant byte address 0x4 - core index']
  #allocation1 [shape = 'u32[144,128]{1,0:T(1,128)}', space=vmem, size = 0x12000, scoped, tag = 'internal scratch']
  #allocation2 [shape = 'f32[1,1]{1,0:T(1,128)S(6)}', space=smem, size = 0x200, scoped, tag = 'scoped memory for tpu_custom_call.1']
  %s0 = inlined_call_operand.vmem [shape: f32[128,12], index: 0, kind: input, shape index: {}]
  %s1 = inlined_call_operand.vmem [shape: bf16[12,128], index: 1, kind: input, shape index: {}]
  %s2 = inlined_call_operand.vmem [shape: f32[1,128], index: 2, kind: input, shape index: {}]
  %s3 = inlined_call_operand.hbm [shape: bf16[128,128], index: 3, kind: input, shape index: {}]
  %s4 = inlined_call_operand.vmem [shape: f32[1,128], index: 4, kind: input, shape index: {}]
  %s5 = inlined_call_operand.vmem [shape: bf16[128,256], index: 5, kind: input, shape index: {}]
  %s6 = inlined_call_operand.vmem [shape: f32[1,256], index: 6, kind: input, shape index: {}]
  %s7 = inlined_call_operand.hbm [shape: bf16[256,256], index: 7, kind: input, shape index: {}]
  %s8 = inlined_call_operand.vmem [shape: f32[1,256], index: 8, kind: input, shape index: {}]
  %s9 = inlined_call_operand.hbm [shape: bf16[256,128], index: 9, kind: input, shape index: {}]
  %s10 = inlined_call_operand.vmem [shape: f32[1,128], index: 10, kind: input, shape index: {}]
  %s11 = inlined_call_operand.hbm [shape: bf16[128,128], index: 11, kind: input, shape index: {}]
  %s12 = inlined_call_operand.vmem [shape: f32[1,128], index: 12, kind: input, shape index: {}]
  %s13 = inlined_call_operand.vmem [shape: bf16[1,128], index: 13, kind: input, shape index: {}]
  %s14 = inlined_call_operand.<no memory space> [shape: f32[1,1], index: 14, kind: input, shape index: {}]
  %s15 = inlined_call_operand.hbm [shape: f32[1,1,128], index: 15, kind: output, shape index: {}]
  %s16 = sld [smem:[#allocation0]]
  $region86: #{tpu_custom_call.1} parent=0
    _
  %s18 = ssub.s32 1, %s16
  %s19 = scalar_select 0, %s18, %s16
  %20 = sst [smem:[#allocation2]] %s14
  $region1: #{tpu_custom_call.1} parent=0
    #allocation3 [shape = 'u8[32768]{0}', space=vmem, size = 0x8000, scoped, tag = 'input window, operand 3, single buffered']
    #allocation4 [shape = 's32[1]{0}', space=sflag, size = 0x4, scoped, tag = 'scoped memory for tpu_custom_call.1']
    #allocation5 [shape = 's32[1]{0}', space=sflag, size = 0x4, scoped, tag = 'scoped memory for tpu_custom_call.1']
    #allocation6 [shape = 'u8[131072]{0}', space=vmem, size = 0x20000, scoped, tag = 'input window, operand 7, single buffered']
    #allocation7 [shape = 's32[1]{0}', space=sflag, size = 0x4, scoped, tag = 'scoped memory for tpu_custom_call.1']
    #allocation8 [shape = 'u8[65536]{0}', space=vmem, size = 0x10000, scoped, tag = 'input window, operand 9, single buffered']
    #allocation9 [shape = 'u8[32768]{0}', space=vmem, size = 0x8000, scoped, tag = 'input window, operand 11, single buffered']
    #allocation10 [shape = 's32[1]{0}', space=sflag, size = 0x4, scoped, tag = 'scoped memory for tpu_custom_call.1']
    #allocation11 [shape = 'u8[512]{0}', space=vmem, size = 0x400, scoped, tag = 'output window, operand 0, single buffered']
    %21 = vsyncpa [#allocation4], 0
    %22 = vsyncpa [#allocation7], 0
    %23 = vsyncpa [#allocation10], 0
    %24 = vsyncpa [#allocation5], 0
    // Predicated region
    $region2: #{tpu_custom_call.1} parent=1 // pred_check
      _
    $region3: #{tpu_custom_call.1} parent=1 // pred_check_branch
      %26 = sbr.rel (0) target = $region5
    $region4: #{tpu_custom_call.1} parent=1 // pred_region
      _
    $region5: #{tpu_custom_call.1} parent=1 // pred_fallthru
      _
    // Predicated region
    $region6: #{tpu_custom_call.1} parent=1 // pred_check
      _
    $region7: #{tpu_custom_call.1} parent=1 // pred_check_branch
      %28 = sbr.rel (0) target = $region9
    $region8: #{tpu_custom_call.1} parent=1 // pred_region
      _
    $region9: #{tpu_custom_call.1} parent=1 // pred_fallthru
      _
    // Predicated region
    $region10: #{tpu_custom_call.1} parent=1 // pred_check
      _
    $region11: #{tpu_custom_call.1} parent=1 // pred_check_branch
      %30 = sbr.rel (0) target = $region13
    $region12: #{tpu_custom_call.1} parent=1 // pred_region
      _
    $region13: #{tpu_custom_call.1} parent=1 // pred_fallthru
      _
    // Predicated region
    $region14: #{tpu_custom_call.1} parent=1 // pred_check
      _
    $region15: #{tpu_custom_call.1} parent=1 // pred_check_branch
      %32 = sbr.rel (0) target = $region17
    $region16: #{tpu_custom_call.1} parent=1 // pred_region
      %s34 = ssub.s32 1024, 1024
      %35 = vsyncadd [#allocation4], %s34
      %s36 = sshll.u32 [#allocation3], 4
      %s37 = int_to_ptr.vmem [resolvable:$true] %s36
      %42 = dma.hbm_to_vmem [thread:$0]  %s3, 1024, %s37, [#allocation4], 64, 64, 4
    $region17: #{tpu_custom_call.1} parent=1 // pred_fallthru
      _
    // Predicated region
    $region18: #{tpu_custom_call.1} parent=1 // pred_check
      _
    $region19: #{tpu_custom_call.1} parent=1 // pred_check_branch
      %44 = sbr.rel (0) target = $region21
    $region20: #{tpu_custom_call.1} parent=1 // pred_region
      _
    $region21: #{tpu_custom_call.1} parent=1 // pred_fallthru
      _
    // Predicated region
    $region22: #{tpu_custom_call.1} parent=1 // pred_check
      _
    $region23: #{tpu_custom_call.1} parent=1 // pred_check_branch
      %46 = sbr.rel (0) target = $region25
    $region24: #{tpu_custom_call.1} parent=1 // pred_region
      _
    $region25: #{tpu_custom_call.1} parent=1 // pred_fallthru
      _
    // Predicated region
    $region26: #{tpu_custom_call.1} parent=1 // pred_check
      _
    $region27: #{tpu_custom_call.1} parent=1 // pred_check_branch
      %48 = sbr.rel (0) target = $region29
    $region28: #{tpu_custom_call.1} parent=1 // pred_region
      _
    $region29: #{tpu_custom_call.1} parent=1 // pred_fallthru
      _
    // Predicated region
    $region30: #{tpu_custom_call.1} parent=1 // pred_check
      _
    $region31: #{tpu_custom_call.1} parent=1 // pred_check_branch
      %50 = sbr.rel (0) target = $region33
    $region32: #{tpu_custom_call.1} parent=1 // pred_region
      %s52 = ssub.s32 4096, 4096
      %53 = vsyncadd [#allocation7], %s52
      %s54 = sshll.u32 [#allocation6], 4
      %s55 = int_to_ptr.vmem [resolvable:$true] %s54
      %60 = dma.hbm_to_vmem [thread:$0]  %s7, 4096, %s55, [#allocation7], 128, 128, 8
    $region33: #{tpu_custom_call.1} parent=1 // pred_fallthru
      _
    // Predicated region
    $region34: #{tpu_custom_call.1} parent=1 // pred_check
      _
    $region35: #{tpu_custom_call.1} parent=1 // pred_check_branch
      %62 = sbr.rel (0) target = $region37
    $region36: #{tpu_custom_call.1} parent=1 // pred_region
      _
    $region37: #{tpu_custom_call.1} parent=1 // pred_fallthru
      _
    // Predicated region
    $region38: #{tpu_custom_call.1} parent=1 // pred_check
      _
    $region39: #{tpu_custom_call.1} parent=1 // pred_check_branch
      %64 = sbr.rel (0) target = $region41
    $region40: #{tpu_custom_call.1} parent=1 // pred_region
      %s66 = ssub.s32 2048, 2048
      %67 = vsyncadd [#allocation7], %s66
      %s68 = sshll.u32 [#allocation8], 4
      %s69 = int_to_ptr.vmem [resolvable:$true] %s68
      %74 = dma.hbm_to_vmem [thread:$0]  %s9, 2048, %s69, [#allocation7], 64, 64, 4
    $region41: #{tpu_custom_call.1} parent=1 // pred_fallthru
      _
    // Predicated region
    $region42: #{tpu_custom_call.1} parent=1 // pred_check
      _
    $region43: #{tpu_custom_call.1} parent=1 // pred_check_branch
      %76 = sbr.rel (0) target = $region45
    $region44: #{tpu_custom_call.1} parent=1 // pred_region
      _
    $region45: #{tpu_custom_call.1} parent=1 // pred_fallthru
      _
    // Predicated region
    $region46: #{tpu_custom_call.1} parent=1 // pred_check
      _
    $region47: #{tpu_custom_call.1} parent=1 // pred_check_branch
      %78 = sbr.rel (0) target = $region49
    $region48: #{tpu_custom_call.1} parent=1 // pred_region
      %s80 = ssub.s32 1024, 1024
      %81 = vsyncadd [#allocation10], %s80
      %s82 = sshll.u32 [#allocation9], 4
      %s83 = int_to_ptr.vmem [resolvable:$true] %s82
      %88 = dma.hbm_to_vmem [thread:$0]  %s11, 1024, %s83, [#allocation10], 64, 64, 4
    $region49: #{tpu_custom_call.1} parent=1 // pred_fallthru
      _
    // Predicated region
    $region50: #{tpu_custom_call.1} parent=1 // pred_check
      _
    $region51: #{tpu_custom_call.1} parent=1 // pred_check_branch
      %90 = sbr.rel (0) target = $region53
    $region52: #{tpu_custom_call.1} parent=1 // pred_region
      _
    $region53: #{tpu_custom_call.1} parent=1 // pred_fallthru
      _
    // Predicated region
    $region54: #{tpu_custom_call.1} parent=1 // pred_check
      _
    $region55: #{tpu_custom_call.1} parent=1 // pred_check_branch
      %92 = sbr.rel (0) target = $region57
    $region56: #{tpu_custom_call.1} parent=1 // pred_region
      _
    $region57: #{tpu_custom_call.1} parent=1 // pred_fallthru
      _
    // Predicated region
    $region58: #{tpu_custom_call.1} parent=1 // pred_check
      _
    $region59: #{tpu_custom_call.1} parent=1 // pred_check_branch
      %94 = sbr.rel (0) target = $region61
    $region60: #{tpu_custom_call.1} parent=1 // pred_region
      _
    $region61: #{tpu_custom_call.1} parent=1 // pred_fallthru
      _
    // Predicated region
    $region62: #{tpu_custom_call.1} parent=1 // pred_check
      _
    $region63: #{tpu_custom_call.1} parent=1 // pred_check_branch
      %96 = sbr.rel (0) target = $region65
    $region64: #{tpu_custom_call.1} parent=1 // pred_region
      %97 = dma.done [#allocation4], 1024
    $region65: #{tpu_custom_call.1} parent=1 // pred_fallthru
      _
    // Predicated region
    $region66: #{tpu_custom_call.1} parent=1 // pred_check
      _
    $region67: #{tpu_custom_call.1} parent=1 // pred_check_branch
      %99 = sbr.rel (0) target = $region69
    $region68: #{tpu_custom_call.1} parent=1 // pred_region
      %100 = dma.done [#allocation7], 4096
    $region69: #{tpu_custom_call.1} parent=1 // pred_fallthru
      _
    // Predicated region
    $region70: #{tpu_custom_call.1} parent=1 // pred_check
      _
    $region71: #{tpu_custom_call.1} parent=1 // pred_check_branch
      %102 = sbr.rel (0) target = $region73
    $region72: #{tpu_custom_call.1} parent=1 // pred_region
      %103 = dma.done [#allocation7], 2048
    $region73: #{tpu_custom_call.1} parent=1 // pred_fallthru
      _
    // Predicated region
    $region74: #{tpu_custom_call.1} parent=1 // pred_check
      _
    $region75: #{tpu_custom_call.1} parent=1 // pred_check_branch
      %105 = sbr.rel (0) target = $region77
    $region76: #{tpu_custom_call.1} parent=1 // pred_region
      %106 = dma.done [#allocation10], 1024
    $region77: #{tpu_custom_call.1} parent=1 // pred_fallthru
      _
    %v108 = vld [vmem:[%s0] sm:$0xff]
    %v109 = vld [vmem:[%s0 + $0x8] sm:$0xff]
    %v110 = vld [vmem:[%s0 + $0x10] sm:$0xff]
    %v111 = vld [vmem:[%s0 + $0x18] sm:$0xff]
    %v112 = vld [vmem:[%s0 + $0x20] sm:$0xff]
    %v113 = vld [vmem:[%s0 + $0x28] sm:$0xff]
    %v114 = vld [vmem:[%s0 + $0x30] sm:$0xff]
    %v115 = vld [vmem:[%s0 + $0x38] sm:$0xff]
    %v116 = vld [vmem:[%s0 + $0x40] sm:$0xff]
    %v117 = vld [vmem:[%s0 + $0x48] sm:$0xff]
    %v118 = vld [vmem:[%s0 + $0x50] sm:$0xff]
    %v119 = vld [vmem:[%s0 + $0x58] sm:$0xff]
    %v120 = vld [vmem:[%s0 + $0x60] sm:$0xff]
    %v121 = vld [vmem:[%s0 + $0x68] sm:$0xff]
    %v122 = vld [vmem:[%s0 + $0x70] sm:$0xff]
    %v123 = vld [vmem:[%s0 + $0x78] sm:$0xff]
    %v124 = vpack.c.bf16 %v109, %v108
    %v125 = vpack.c.bf16 %v111, %v110
    %v126 = vpack.c.bf16 %v113, %v112
    %v127 = vpack.c.bf16 %v115, %v114
    %v128 = vpack.c.bf16 %v117, %v116
    %v129 = vpack.c.bf16 %v119, %v118
    %v130 = vpack.c.bf16 %v121, %v120
    %v131 = vpack.c.bf16 %v123, %v122
    %v132 = vld [vmem:[%s1] sm:$0xf]
    %v133 = vld [vmem:[%s1 + $0x4] sm:$0x3]
    %v134 = vld [vmem:[%s2] sm:$0x1]
    %v136 = vlaneseq
    %v137 = vshrl.u32 %v136, 7
    %v138 = vsub.s32 0, %v137
    %v139 = vrot.slane %v134, %v138
    %v143 = vunpack.c.l.b16 %v132
    %v144 = vunpack.c.l.b16 %v133
    %v145 = vpack.c.b16 %v144, %v143
    %vm146 = vcmask 97280
    %v148 = vsel %vm146, %v124, 0
    %v151 = vsel %vm146, %v125, 0
    %v154 = vsel %vm146, %v126, 0
    %v157 = vsel %vm146, %v127, 0
    %v160 = vsel %vm146, %v128, 0
    %v163 = vsel %vm146, %v129, 0
    %v166 = vsel %vm146, %v130, 0
    %v169 = vsel %vm146, %v131, 0
    %vm171 = vcmask 1045504
    %v173 = vsel %vm171, %v145, 0
    %175 = vmatprep.subr.bf16.mxu0 0
    %176 = vmatpush1.bf16.msra.mxu0 0
    %177 = vmatprep.subr.bf16.mxu0 0
    %178 = vmatpush1.bf16.msra.mxu0 0
    %179 = vmatprep.subr.bf16.mxu0 0
    %180 = vmatpush1.bf16.msra.mxu0 0
    %181 = vmatprep.subr.bf16.mxu0 0
    %182 = vmatpush1.bf16.msra.mxu0 0
    %183 = vmatprep.subr.bf16.mxu0 0
    %184 = vmatpush1.bf16.msra.mxu0 0
    %185 = vmatprep.subr.bf16.mxu0 0
    %186 = vmatpush1.bf16.msra.mxu0 0
    %187 = vmatprep.subr.bf16.mxu0 0
    %188 = vmatpush1.bf16.msra.mxu0 0
    %189 = vmatprep.subr.bf16.mxu0 0
    %190 = vmatpush1.bf16.msra.mxu0 %v173
    %191 = vmatprep.subr.bf16.mxu0 0
    %192 = vmatpush2.bf16.msra.mxu0 0
    %193 = vmatprep.subr.bf16.mxu0 0
    %194 = vmatpush2.bf16.msra.mxu0 0
    %195 = vmatprep.subr.bf16.mxu0 0
    %196 = vmatpush2.bf16.msra.mxu0 0
    %197 = vmatprep.subr.bf16.mxu0 0
    %198 = vmatpush2.bf16.msra.mxu0 0
    %199 = vmatprep.subr.bf16.mxu0 0
    %200 = vmatpush2.bf16.msra.mxu0 0
    %201 = vmatprep.subr.bf16.mxu0 0
    %202 = vmatpush2.bf16.msra.mxu0 0
    %203 = vmatprep.subr.bf16.mxu0 0
    %204 = vmatpush2.bf16.msra.mxu0 0
    %205 = vmatprep.subr.bf16.mxu0 0
    %206 = vmatpush2.bf16.msra.mxu0 0
    %207 = vmatprep.mubr.bf16.mxu0 0
    %208 = vmatmul.mubr.bf16.gmra.mxu0 %v148
    %v209 = vpop.f32.mrf.mxu0
    %v210 = vadd.f32 %v139, %v209
    %v211 = vpop.f32.mrf.mxu0
    %v212 = vpop.f32.mrf.mxu0
    %v213 = vadd.f32 %v139, %v212
    %v214 = vpop.f32.mrf.mxu0
    %215 = vmatprep.mubr.bf16.mxu0 0
    %216 = vmatmul.mubr.bf16.gmra.mxu0 %v151
    %v217 = vpop.f32.mrf.mxu0
    %v218 = vadd.f32 %v139, %v217
    %v219 = vpop.f32.mrf.mxu0
    %v220 = vpop.f32.mrf.mxu0
    %v221 = vadd.f32 %v139, %v220
    %v222 = vpop.f32.mrf.mxu0
    %223 = vmatprep.mubr.bf16.mxu0 0
    %224 = vmatmul.mubr.bf16.gmra.mxu0 %v154
    %v225 = vpop.f32.mrf.mxu0
    %v226 = vadd.f32 %v139, %v225
    %v227 = vpop.f32.mrf.mxu0
    %v228 = vpop.f32.mrf.mxu0
    %v229 = vadd.f32 %v139, %v228
    %v230 = vpop.f32.mrf.mxu0
    %231 = vmatprep.mubr.bf16.mxu0 0
    %232 = vmatmul.mubr.bf16.gmra.mxu0 %v157
    %v233 = vpop.f32.mrf.mxu0
    %v234 = vadd.f32 %v139, %v233
    %v235 = vpop.f32.mrf.mxu0
    %v236 = vpop.f32.mrf.mxu0
    %v237 = vadd.f32 %v139, %v236
    %v238 = vpop.f32.mrf.mxu0
    %239 = vmatprep.mubr.bf16.mxu0 0
    %240 = vmatmul.mubr.bf16.gmra.mxu0 %v160
    %v241 = vpop.f32.mrf.mxu0
    %v242 = vadd.f32 %v139, %v241
    %v243 = vpop.f32.mrf.mxu0
    %v244 = vpop.f32.mrf.mxu0
    %v245 = vadd.f32 %v139, %v244
    %v246 = vpop.f32.mrf.mxu0
    %247 = vmatprep.mubr.bf16.mxu0 0
    %248 = vmatmul.mubr.bf16.gmra.mxu0 %v163
    %v249 = vpop.f32.mrf.mxu0
    %v250 = vadd.f32 %v139, %v249
    %v251 = vpop.f32.mrf.mxu0
    %v252 = vpop.f32.mrf.mxu0
    %v253 = vadd.f32 %v139, %v252
    %v254 = vpop.f32.mrf.mxu0
    %255 = vmatprep.mubr.bf16.mxu0 0
    %256 = vmatmul.mubr.bf16.gmra.mxu0 %v166
    %v257 = vpop.f32.mrf.mxu0
    %v258 = vadd.f32 %v139, %v257
    %v259 = vpop.f32.mrf.mxu0
    %v260 = vpop.f32.mrf.mxu0
    %v261 = vadd.f32 %v139, %v260
    %v262 = vpop.f32.mrf.mxu0
    %263 = vmatprep.mubr.bf16.mxu0 0
    %264 = vmatmul.mubr.bf16.gmra.mxu0 %v169
    %v265 = vpop.f32.mrf.mxu0
    %v266 = vadd.f32 %v139, %v265
    %v267 = vpop.f32.mrf.mxu0
    %v268 = vpop.f32.mrf.mxu0
    %v269 = vadd.f32 %v139, %v268
    %v270 = vpop.f32.mrf.mxu0
    %271 = vdwg.mxu0
    %v272 = vmax.f32 %v210, 0.0
    %v273 = vmax.f32 %v213, 0.0
    %v274 = vmax.f32 %v218, 0.0
    %v275 = vmax.f32 %v221, 0.0
    %v276 = vmax.f32 %v226, 0.0
    %v277 = vmax.f32 %v229, 0.0
    %v278 = vmax.f32 %v234, 0.0
    %v279 = vmax.f32 %v237, 0.0
    %v280 = vmax.f32 %v242, 0.0
    %v281 = vmax.f32 %v245, 0.0
    %v282 = vmax.f32 %v250, 0.0
    %v283 = vmax.f32 %v253, 0.0
    %v284 = vmax.f32 %v258, 0.0
    %v285 = vmax.f32 %v261, 0.0
    %v286 = vmax.f32 %v266, 0.0
    %v287 = vmax.f32 %v269, 0.0
    %v288 = vpack.c.bf16 %v273, %v272
    %v289 = vpack.c.bf16 %v275, %v274
    %v290 = vpack.c.bf16 %v277, %v276
    %v291 = vpack.c.bf16 %v279, %v278
    %v292 = vpack.c.bf16 %v281, %v280
    %v293 = vpack.c.bf16 %v283, %v282
    %v294 = vpack.c.bf16 %v285, %v284
    %v295 = vpack.c.bf16 %v287, %v286
    %v296 = vld [vmem:[#allocation3] sm:$0xf]
    %v297 = vld [vmem:[#allocation3 + $0x4] sm:$0xf]
    %v298 = vld [vmem:[#allocation3 + $0x8] sm:$0xf]
    %v299 = vld [vmem:[#allocation3 + $0xc] sm:$0xf]
    %v300 = vld [vmem:[#allocation3 + $0x10] sm:$0xf]
    %v301 = vld [vmem:[#allocation3 + $0x14] sm:$0xf]
    %v302 = vld [vmem:[#allocation3 + $0x18] sm:$0xf]
    %v303 = vld [vmem:[#allocation3 + $0x1c] sm:$0xf]
    %v304 = vld [vmem:[#allocation3 + $0x20] sm:$0xf]
    %v305 = vld [vmem:[#allocation3 + $0x24] sm:$0xf]
    %v306 = vld [vmem:[#allocation3 + $0x28] sm:$0xf]
    %v307 = vld [vmem:[#allocation3 + $0x2c] sm:$0xf]
    %v308 = vld [vmem:[#allocation3 + $0x30] sm:$0xf]
    %v309 = vld [vmem:[#allocation3 + $0x34] sm:$0xf]
    %v310 = vld [vmem:[#allocation3 + $0x38] sm:$0xf]
    %v311 = vld [vmem:[#allocation3 + $0x3c] sm:$0xf]
    %v312 = vld [vmem:[%s4] sm:$0x1]
    %v314 = vlaneseq
    %v315 = vshrl.u32 %v314, 7
    %v316 = vsub.s32 0, %v315
    %v317 = vrot.slane %v312, %v316
    %v335 = vunpack.c.l.b16 %v296
    %v336 = vunpack.c.l.b16 %v297
    %v337 = vunpack.c.l.b16 %v298
    %v338 = vunpack.c.l.b16 %v299
    %v339 = vunpack.c.l.b16 %v300
    %v340 = vunpack.c.l.b16 %v301
    %v341 = vunpack.c.l.b16 %v302
    %v342 = vunpack.c.l.b16 %v303
    %v343 = vunpack.c.l.b16 %v304
    %v344 = vunpack.c.l.b16 %v305
    %v345 = vunpack.c.l.b16 %v306
    %v346 = vunpack.c.l.b16 %v307
    %v347 = vunpack.c.l.b16 %v308
    %v348 = vunpack.c.l.b16 %v309
    %v349 = vunpack.c.l.b16 %v310
    %v350 = vunpack.c.l.b16 %v311
    %v351 = vpack.c.b16 %v336, %v335
    %v352 = vpack.c.b16 %v338, %v337
    %v353 = vpack.c.b16 %v340, %v339
    %v354 = vpack.c.b16 %v342, %v341
    %v355 = vpack.c.b16 %v344, %v343
    %v356 = vpack.c.b16 %v346, %v345
    %v357 = vpack.c.b16 %v348, %v347
    %v358 = vpack.c.b16 %v350, %v349
    %367 = vmatprep.subr.bf16.mxu0 0
    %368 = vmatpush1.bf16.msra.mxu0 %v358
    %369 = vmatprep.subr.bf16.mxu0 0
    %370 = vmatpush1.bf16.msra.mxu0 %v357
    %371 = vmatprep.subr.bf16.mxu0 0
    %372 = vmatpush1.bf16.msra.mxu0 %v356
    %373 = vmatprep.subr.bf16.mxu0 0
    %374 = vmatpush1.bf16.msra.mxu0 %v355
    %375 = vmatprep.subr.bf16.mxu0 0
    %376 = vmatpush1.bf16.msra.mxu0 %v354
    %377 = vmatprep.subr.bf16.mxu0 0
    %378 = vmatpush1.bf16.msra.mxu0 %v353
    %379 = vmatprep.subr.bf16.mxu0 0
    %380 = vmatpush1.bf16.msra.mxu0 %v352
    %381 = vmatprep.subr.bf16.mxu0 0
    %382 = vmatpush1.bf16.msra.mxu0 %v351
    %383 = vmatprep.subr.bf16.mxu0 0
    %384 = vmatpush2.bf16.msra.mxu0 0
    %385 = vmatprep.subr.bf16.mxu0 0
    %386 = vmatpush2.bf16.msra.mxu0 0
    %387 = vmatprep.subr.bf16.mxu0 0
    %388 = vmatpush2.bf16.msra.mxu0 0
    %389 = vmatprep.subr.bf16.mxu0 0
    %390 = vmatpush2.bf16.msra.mxu0 0
    %391 = vmatprep.subr.bf16.mxu0 0
    %392 = vmatpush2.bf16.msra.mxu0 0
    %393 = vmatprep.subr.bf16.mxu0 0
    %394 = vmatpush2.bf16.msra.mxu0 0
    %395 = vmatprep.subr.bf16.mxu0 0
    %396 = vmatpush2.bf16.msra.mxu0 0
    %397 = vmatprep.subr.bf16.mxu0 0
    %398 = vmatpush2.bf16.msra.mxu0 0
    %399 = vmatprep.mubr.bf16.mxu0 0
    %400 = vmatmul.mubr.bf16.gmra.mxu0 %v288
    %v401 = vpop.f32.mrf.mxu0
    %v402 = vadd.f32 %v317, %v401
    %v403 = vpop.f32.mrf.mxu0
    %v404 = vpop.f32.mrf.mxu0
    %v405 = vadd.f32 %v317, %v404
    %v406 = vpop.f32.mrf.mxu0
    %407 = vmatprep.mubr.bf16.mxu0 0
    %408 = vmatmul.mubr.bf16.gmra.mxu0 %v289
    %v409 = vpop.f32.mrf.mxu0
    %v410 = vadd.f32 %v317, %v409
    %v411 = vpop.f32.mrf.mxu0
    %v412 = vpop.f32.mrf.mxu0
    %v413 = vadd.f32 %v317, %v412
    %v414 = vpop.f32.mrf.mxu0
    %415 = vmatprep.mubr.bf16.mxu0 0
    %416 = vmatmul.mubr.bf16.gmra.mxu0 %v290
    %v417 = vpop.f32.mrf.mxu0
    %v418 = vadd.f32 %v317, %v417
    %v419 = vpop.f32.mrf.mxu0
    %v420 = vpop.f32.mrf.mxu0
    %v421 = vadd.f32 %v317, %v420
    %v422 = vpop.f32.mrf.mxu0
    %423 = vmatprep.mubr.bf16.mxu0 0
    %424 = vmatmul.mubr.bf16.gmra.mxu0 %v291
    %v425 = vpop.f32.mrf.mxu0
    %v426 = vadd.f32 %v317, %v425
    %v427 = vpop.f32.mrf.mxu0
    %v428 = vpop.f32.mrf.mxu0
    %v429 = vadd.f32 %v317, %v428
    %v430 = vpop.f32.mrf.mxu0
    %431 = vmatprep.mubr.bf16.mxu0 0
    %432 = vmatmul.mubr.bf16.gmra.mxu0 %v292
    %v433 = vpop.f32.mrf.mxu0
    %v434 = vadd.f32 %v317, %v433
    %v435 = vpop.f32.mrf.mxu0
    %v436 = vpop.f32.mrf.mxu0
    %v437 = vadd.f32 %v317, %v436
    %v438 = vpop.f32.mrf.mxu0
    %439 = vmatprep.mubr.bf16.mxu0 0
    %440 = vmatmul.mubr.bf16.gmra.mxu0 %v293
    %v441 = vpop.f32.mrf.mxu0
    %v442 = vadd.f32 %v317, %v441
    %v443 = vpop.f32.mrf.mxu0
    %v444 = vpop.f32.mrf.mxu0
    %v445 = vadd.f32 %v317, %v444
    %v446 = vpop.f32.mrf.mxu0
    %447 = vmatprep.mubr.bf16.mxu0 0
    %448 = vmatmul.mubr.bf16.gmra.mxu0 %v294
    %v449 = vpop.f32.mrf.mxu0
    %v450 = vadd.f32 %v317, %v449
    %v451 = vpop.f32.mrf.mxu0
    %v452 = vpop.f32.mrf.mxu0
    %v453 = vadd.f32 %v317, %v452
    %v454 = vpop.f32.mrf.mxu0
    %455 = vmatprep.mubr.bf16.mxu0 0
    %456 = vmatmul.mubr.bf16.gmra.mxu0 %v295
    %v457 = vpop.f32.mrf.mxu0
    %v458 = vadd.f32 %v317, %v457
    %v459 = vpop.f32.mrf.mxu0
    %v460 = vpop.f32.mrf.mxu0
    %v461 = vadd.f32 %v317, %v460
    %v462 = vpop.f32.mrf.mxu0
    %463 = vdwg.mxu0
    %v464 = vmax.f32 %v402, 0.0
    %v465 = vmax.f32 %v405, 0.0
    %v466 = vmax.f32 %v410, 0.0
    %v467 = vmax.f32 %v413, 0.0
    %v468 = vmax.f32 %v418, 0.0
    %v469 = vmax.f32 %v421, 0.0
    %v470 = vmax.f32 %v426, 0.0
    %v471 = vmax.f32 %v429, 0.0
    %v472 = vmax.f32 %v434, 0.0
    %v473 = vmax.f32 %v437, 0.0
    %v474 = vmax.f32 %v442, 0.0
    %v475 = vmax.f32 %v445, 0.0
    %v476 = vmax.f32 %v450, 0.0
    %v477 = vmax.f32 %v453, 0.0
    %v478 = vmax.f32 %v458, 0.0
    %v479 = vmax.f32 %v461, 0.0
    %v480 = vpack.c.bf16 %v465, %v464
    %v481 = vpack.c.bf16 %v467, %v466
    %v482 = vpack.c.bf16 %v469, %v468
    %v483 = vpack.c.bf16 %v471, %v470
    %v484 = vpack.c.bf16 %v473, %v472
    %v485 = vpack.c.bf16 %v475, %v474
    %v486 = vpack.c.bf16 %v477, %v476
    %v487 = vpack.c.bf16 %v479, %v478
    %v488 = vld [vmem:[%s5] sm:$0xff]
    %v489 = vld [vmem:[%s5 + $0x8] sm:$0xff]
    %v490 = vld [vmem:[%s5 + $0x10] sm:$0xff]
    %v491 = vld [vmem:[%s5 + $0x18] sm:$0xff]
    %v492 = vld [vmem:[%s5 + $0x20] sm:$0xff]
    %v493 = vld [vmem:[%s5 + $0x28] sm:$0xff]
    %v494 = vld [vmem:[%s5 + $0x30] sm:$0xff]
    %v495 = vld [vmem:[%s5 + $0x38] sm:$0xff]
    %v496 = vld [vmem:[%s5 + $0x40] sm:$0xff]
    %v497 = vld [vmem:[%s5 + $0x48] sm:$0xff]
    %v498 = vld [vmem:[%s5 + $0x50] sm:$0xff]
    %v499 = vld [vmem:[%s5 + $0x58] sm:$0xff]
    %v500 = vld [vmem:[%s5 + $0x60] sm:$0xff]
    %v501 = vld [vmem:[%s5 + $0x68] sm:$0xff]
    %v502 = vld [vmem:[%s5 + $0x70] sm:$0xff]
    %v503 = vld [vmem:[%s5 + $0x78] sm:$0xff]
    %v504 = vld [vmem:[%s6] sm:$0x3]
    %v506 = vlaneseq
    %v507 = vshrl.u32 %v506, 7
    %v508 = vsub.s32 0, %v507
    %v509 = vrot.slane %v504, %v508
    %v510 = vlaneseq
    %v511 = vshrl.u32 %v510, 7
    %v512 = vsub.s32 1, %v511
    %v513 = vrot.slane %v504, %v512
    %v532 = vunpack.c.l.b16 %v488
    %v533 = vunpack.c.h.b16 %v488
    %v534 = vunpack.c.l.b16 %v489
    %v535 = vunpack.c.h.b16 %v489
    %v536 = vunpack.c.l.b16 %v490
    %v537 = vunpack.c.h.b16 %v490
    %v538 = vunpack.c.l.b16 %v491
    %v539 = vunpack.c.h.b16 %v491
    %v540 = vunpack.c.l.b16 %v492
    %v541 = vunpack.c.h.b16 %v492
    %v542 = vunpack.c.l.b16 %v493
    %v543 = vunpack.c.h.b16 %v493
    %v544 = vunpack.c.l.b16 %v494
    %v545 = vunpack.c.h.b16 %v494
    %v546 = vunpack.c.l.b16 %v495
    %v547 = vunpack.c.h.b16 %v495
    %v548 = vunpack.c.l.b16 %v496
    %v549 = vunpack.c.h.b16 %v496
    %v550 = vunpack.c.l.b16 %v497
    %v551 = vunpack.c.h.b16 %v497
    %v552 = vunpack.c.l.b16 %v498
    %v553 = vunpack.c.h.b16 %v498
    %v554 = vunpack.c.l.b16 %v499
    %v555 = vunpack.c.h.b16 %v499
    %v556 = vunpack.c.l.b16 %v500
    %v557 = vunpack.c.h.b16 %v500
    %v558 = vunpack.c.l.b16 %v501
    %v559 = vunpack.c.h.b16 %v501
    %v560 = vunpack.c.l.b16 %v502
    %v561 = vunpack.c.h.b16 %v502
    %v562 = vunpack.c.l.b16 %v503
    %v563 = vunpack.c.h.b16 %v503
    %v564 = vpack.c.b16 %v534, %v532
    %v565 = vpack.c.b16 %v535, %v533
    %v566 = vpack.c.b16 %v538, %v536
    %v567 = vpack.c.b16 %v539, %v537
    %v568 = vpack.c.b16 %v542, %v540
    %v569 = vpack.c.b16 %v543, %v541
    %v570 = vpack.c.b16 %v546, %v544
    %v571 = vpack.c.b16 %v547, %v545
    %v572 = vpack.c.b16 %v550, %v548
    %v573 = vpack.c.b16 %v551, %v549
    %v574 = vpack.c.b16 %v554, %v552
    %v575 = vpack.c.b16 %v555, %v553
    %v576 = vpack.c.b16 %v558, %v556
    %v577 = vpack.c.b16 %v559, %v557
    %v578 = vpack.c.b16 %v562, %v560
    %v579 = vpack.c.b16 %v563, %v561
    %596 = vmatprep.subr.bf16.mxu0 %v579
    %597 = vmatpush1.bf16.msra.mxu0 %v578
    %598 = vmatprep.subr.bf16.mxu0 %v577
    %599 = vmatpush1.bf16.msra.mxu0 %v576
    %600 = vmatprep.subr.bf16.mxu0 %v575
    %601 = vmatpush1.bf16.msra.mxu0 %v574
    %602 = vmatprep.subr.bf16.mxu0 %v573
    %603 = vmatpush1.bf16.msra.mxu0 %v572
    %604 = vmatprep.subr.bf16.mxu0 %v571
    %605 = vmatpush1.bf16.msra.mxu0 %v570
    %606 = vmatprep.subr.bf16.mxu0 %v569
    %607 = vmatpush1.bf16.msra.mxu0 %v568
    %608 = vmatprep.subr.bf16.mxu0 %v567
    %609 = vmatpush1.bf16.msra.mxu0 %v566
    %610 = vmatprep.subr.bf16.mxu0 %v565
    %611 = vmatpush1.bf16.msra.mxu0 %v564
    %612 = vmatprep.subr.bf16.mxu0 0
    %613 = vmatpush2.bf16.msra.mxu0 0
    %614 = vmatprep.subr.bf16.mxu0 0
    %615 = vmatpush2.bf16.msra.mxu0 0
    %616 = vmatprep.subr.bf16.mxu0 0
    %617 = vmatpush2.bf16.msra.mxu0 0
    %618 = vmatprep.subr.bf16.mxu0 0
    %619 = vmatpush2.bf16.msra.mxu0 0
    %620 = vmatprep.subr.bf16.mxu0 0
    %621 = vmatpush2.bf16.msra.mxu0 0
    %622 = vmatprep.subr.bf16.mxu0 0
    %623 = vmatpush2.bf16.msra.mxu0 0
    %624 = vmatprep.subr.bf16.mxu0 0
    %625 = vmatpush2.bf16.msra.mxu0 0
    %626 = vmatprep.subr.bf16.mxu0 0
    %627 = vmatpush2.bf16.msra.mxu0 0
    %628 = vmatprep.mubr.bf16.mxu0 0
    %629 = vmatmul.mubr.bf16.gmra.mxu0 %v480
    %v630 = vpop.f32.mrf.mxu0
    %v631 = vadd.f32 %v509, %v630
    %v632 = vpop.f32.mrf.mxu0
    %v633 = vadd.f32 %v513, %v632
    %v634 = vpop.f32.mrf.mxu0
    %v635 = vadd.f32 %v509, %v634
    %v636 = vpop.f32.mrf.mxu0
    %v637 = vadd.f32 %v513, %v636
    %638 = vmatprep.mubr.bf16.mxu0 0
    %639 = vmatmul.mubr.bf16.gmra.mxu0 %v481
    %v640 = vpop.f32.mrf.mxu0
    %v641 = vadd.f32 %v509, %v640
    %v642 = vpop.f32.mrf.mxu0
    %v643 = vadd.f32 %v513, %v642
    %v644 = vpop.f32.mrf.mxu0
    %v645 = vadd.f32 %v509, %v644
    %v646 = vpop.f32.mrf.mxu0
    %v647 = vadd.f32 %v513, %v646
    %648 = vmatprep.mubr.bf16.mxu0 0
    %649 = vmatmul.mubr.bf16.gmra.mxu0 %v482
    %v650 = vpop.f32.mrf.mxu0
    %v651 = vadd.f32 %v509, %v650
    %v652 = vpop.f32.mrf.mxu0
    %v653 = vadd.f32 %v513, %v652
    %v654 = vpop.f32.mrf.mxu0
    %v655 = vadd.f32 %v509, %v654
    %v656 = vpop.f32.mrf.mxu0
    %v657 = vadd.f32 %v513, %v656
    %658 = vmatprep.mubr.bf16.mxu0 0
    %659 = vmatmul.mubr.bf16.gmra.mxu0 %v483
    %v660 = vpop.f32.mrf.mxu0
    %v661 = vadd.f32 %v509, %v660
    %v662 = vpop.f32.mrf.mxu0
    %v663 = vadd.f32 %v513, %v662
    %v664 = vpop.f32.mrf.mxu0
    %v665 = vadd.f32 %v509, %v664
    %v666 = vpop.f32.mrf.mxu0
    %v667 = vadd.f32 %v513, %v666
    %668 = vmatprep.mubr.bf16.mxu0 0
    %669 = vmatmul.mubr.bf16.gmra.mxu0 %v484
    %v670 = vpop.f32.mrf.mxu0
    %v671 = vadd.f32 %v509, %v670
    %v672 = vpop.f32.mrf.mxu0
    %v673 = vadd.f32 %v513, %v672
    %v674 = vpop.f32.mrf.mxu0
    %v675 = vadd.f32 %v509, %v674
    %v676 = vpop.f32.mrf.mxu0
    %v677 = vadd.f32 %v513, %v676
    %678 = vmatprep.mubr.bf16.mxu0 0
    %679 = vmatmul.mubr.bf16.gmra.mxu0 %v485
    %v680 = vpop.f32.mrf.mxu0
    %v681 = vadd.f32 %v509, %v680
    %v682 = vpop.f32.mrf.mxu0
    %v683 = vadd.f32 %v513, %v682
    %v684 = vpop.f32.mrf.mxu0
    %v685 = vadd.f32 %v509, %v684
    %v686 = vpop.f32.mrf.mxu0
    %v687 = vadd.f32 %v513, %v686
    %688 = vmatprep.mubr.bf16.mxu0 0
    %689 = vmatmul.mubr.bf16.gmra.mxu0 %v486
    %v690 = vpop.f32.mrf.mxu0
    %v691 = vadd.f32 %v509, %v690
    %v692 = vpop.f32.mrf.mxu0
    %v693 = vadd.f32 %v513, %v692
    %v694 = vpop.f32.mrf.mxu0
    %v695 = vadd.f32 %v509, %v694
    %v696 = vpop.f32.mrf.mxu0
    %v697 = vadd.f32 %v513, %v696
    %698 = vmatprep.mubr.bf16.mxu0 0
    %699 = vmatmul.mubr.bf16.gmra.mxu0 %v487
    %v700 = vpop.f32.mrf.mxu0
    %v701 = vadd.f32 %v509, %v700
    %v702 = vpop.f32.mrf.mxu0
    %v703 = vadd.f32 %v513, %v702
    %v704 = vpop.f32.mrf.mxu0
    %v705 = vadd.f32 %v509, %v704
    %v706 = vpop.f32.mrf.mxu0
    %v707 = vadd.f32 %v513, %v706
    %708 = vdwg.mxu0
    %v709 = vmax.f32 %v631, 0.0
    %v710 = vmax.f32 %v633, 0.0
    %v711 = vmax.f32 %v635, 0.0
    %v712 = vmax.f32 %v637, 0.0
    %v713 = vmax.f32 %v641, 0.0
    %v714 = vmax.f32 %v643, 0.0
    %v715 = vmax.f32 %v645, 0.0
    %v716 = vmax.f32 %v647, 0.0
    %v717 = vmax.f32 %v651, 0.0
    %v718 = vmax.f32 %v653, 0.0
    %v719 = vmax.f32 %v655, 0.0
    %v720 = vmax.f32 %v657, 0.0
    %v721 = vmax.f32 %v661, 0.0
    %v722 = vmax.f32 %v663, 0.0
    %v723 = vmax.f32 %v665, 0.0
    %v724 = vmax.f32 %v667, 0.0
    %v725 = vmax.f32 %v671, 0.0
    %v726 = vmax.f32 %v673, 0.0
    %v727 = vmax.f32 %v675, 0.0
    %v728 = vmax.f32 %v677, 0.0
    %v729 = vmax.f32 %v681, 0.0
    %v730 = vmax.f32 %v683, 0.0
    %v731 = vmax.f32 %v685, 0.0
    %v732 = vmax.f32 %v687, 0.0
    %v733 = vmax.f32 %v691, 0.0
    %v734 = vmax.f32 %v693, 0.0
    %v735 = vmax.f32 %v695, 0.0
    %v736 = vmax.f32 %v697, 0.0
    %v737 = vmax.f32 %v701, 0.0
    %v738 = vmax.f32 %v703, 0.0
    %v739 = vmax.f32 %v705, 0.0
    %v740 = vmax.f32 %v707, 0.0
    %v741 = vpack.c.bf16 %v711, %v709
    %v742 = vpack.c.bf16 %v712, %v710
    %v743 = vpack.c.bf16 %v715, %v713
    %v744 = vpack.c.bf16 %v716, %v714
    %v745 = vpack.c.bf16 %v719, %v717
    %v746 = vpack.c.bf16 %v720, %v718
    %v747 = vpack.c.bf16 %v723, %v721
    %v748 = vpack.c.bf16 %v724, %v722
    %v749 = vpack.c.bf16 %v727, %v725
    %v750 = vpack.c.bf16 %v728, %v726
    %v751 = vpack.c.bf16 %v731, %v729
    %v752 = vpack.c.bf16 %v732, %v730
    %v753 = vpack.c.bf16 %v735, %v733
    %v754 = vpack.c.bf16 %v736, %v734
    %v755 = vpack.c.bf16 %v739, %v737
    %v756 = vpack.c.bf16 %v740, %v738
    %v757 = vld [vmem:[#allocation6] sm:$0xff]
    %v758 = vld [vmem:[#allocation6 + $0x8] sm:$0xff]
    %v759 = vld [vmem:[#allocation6 + $0x10] sm:$0xff]
    %v760 = vld [vmem:[#allocation6 + $0x18] sm:$0xff]
    %v761 = vld [vmem:[#allocation6 + $0x20] sm:$0xff]
    %v762 = vld [vmem:[#allocation6 + $0x28] sm:$0xff]
    %v763 = vld [vmem:[#allocation6 + $0x30] sm:$0xff]
    %v764 = vld [vmem:[#allocation6 + $0x38] sm:$0xff]
    %v765 = vld [vmem:[#allocation6 + $0x40] sm:$0xff]
    %v766 = vld [vmem:[#allocation6 + $0x48] sm:$0xff]
    %v767 = vld [vmem:[#allocation6 + $0x50] sm:$0xff]
    %v768 = vld [vmem:[#allocation6 + $0x58] sm:$0xff]
    %v769 = vld [vmem:[#allocation6 + $0x60] sm:$0xff]
    %v770 = vld [vmem:[#allocation6 + $0x68] sm:$0xff]
    %v771 = vld [vmem:[#allocation6 + $0x70] sm:$0xff]
    %v772 = vld [vmem:[#allocation6 + $0x78] sm:$0xff]
    %v773 = vld [vmem:[#allocation6 + $0x80] sm:$0xff]
    %v774 = vld [vmem:[#allocation6 + $0x88] sm:$0xff]
    %v775 = vld [vmem:[#allocation6 + $0x90] sm:$0xff]
    %v776 = vld [vmem:[#allocation6 + $0x98] sm:$0xff]
    %v777 = vld [vmem:[#allocation6 + $0xa0] sm:$0xff]
    %v778 = vld [vmem:[#allocation6 + $0xa8] sm:$0xff]
    %v779 = vld [vmem:[#allocation6 + $0xb0] sm:$0xff]
    %v780 = vld [vmem:[#allocation6 + $0xb8] sm:$0xff]
    %v781 = vld [vmem:[#allocation6 + $0xc0] sm:$0xff]
    %v782 = vld [vmem:[#allocation6 + $0xc8] sm:$0xff]
    %v783 = vld [vmem:[#allocation6 + $0xd0] sm:$0xff]
    %v784 = vld [vmem:[#allocation6 + $0xd8] sm:$0xff]
    %v785 = vld [vmem:[#allocation6 + $0xe0] sm:$0xff]
    %v786 = vld [vmem:[#allocation6 + $0xe8] sm:$0xff]
    %v787 = vld [vmem:[#allocation6 + $0xf0] sm:$0xff]
    %v788 = vld [vmem:[#allocation6 + $0xf8] sm:$0xff]
    %v789 = vld [vmem:[%s8] sm:$0x3]
    %v791 = vlaneseq
    %v792 = vshrl.u32 %v791, 7
    %v793 = vsub.s32 0, %v792
    %v794 = vrot.slane %v789, %v793
    %v795 = vlaneseq
    %v796 = vshrl.u32 %v795, 7
    %v797 = vsub.s32 1, %v796
    %v798 = vrot.slane %v789, %v797
    %v833 = vunpack.c.l.b16 %v757
    %v834 = vunpack.c.h.b16 %v757
    %v835 = vunpack.c.l.b16 %v758
    %v836 = vunpack.c.h.b16 %v758
    %v837 = vunpack.c.l.b16 %v759
    %v838 = vunpack.c.h.b16 %v759
    %v839 = vunpack.c.l.b16 %v760
    %v840 = vunpack.c.h.b16 %v760
    %v841 = vunpack.c.l.b16 %v761
    %v842 = vunpack.c.h.b16 %v761
    %v843 = vunpack.c.l.b16 %v762
    %v844 = vunpack.c.h.b16 %v762
    %v845 = vunpack.c.l.b16 %v763
    %v846 = vunpack.c.h.b16 %v763
    %v847 = vunpack.c.l.b16 %v764
    %v848 = vunpack.c.h.b16 %v764
    %v849 = vunpack.c.l.b16 %v765
    %v850 = vunpack.c.h.b16 %v765
    %v851 = vunpack.c.l.b16 %v766
    %v852 = vunpack.c.h.b16 %v766
    %v853 = vunpack.c.l.b16 %v767
    %v854 = vunpack.c.h.b16 %v767
    %v855 = vunpack.c.l.b16 %v768
    %v856 = vunpack.c.h.b16 %v768
    %v857 = vunpack.c.l.b16 %v769
    %v858 = vunpack.c.h.b16 %v769
    %v859 = vunpack.c.l.b16 %v770
    %v860 = vunpack.c.h.b16 %v770
    %v861 = vunpack.c.l.b16 %v771
    %v862 = vunpack.c.h.b16 %v771
    %v863 = vunpack.c.l.b16 %v772
    %v864 = vunpack.c.h.b16 %v772
    %v865 = vunpack.c.l.b16 %v773
    %v866 = vunpack.c.h.b16 %v773
    %v867 = vunpack.c.l.b16 %v774
    %v868 = vunpack.c.h.b16 %v774
    %v869 = vunpack.c.l.b16 %v775
    %v870 = vunpack.c.h.b16 %v775
    %v871 = vunpack.c.l.b16 %v776
    %v872 = vunpack.c.h.b16 %v776
    %v873 = vunpack.c.l.b16 %v777
    %v874 = vunpack.c.h.b16 %v777
    %v875 = vunpack.c.l.b16 %v778
    %v876 = vunpack.c.h.b16 %v778
    %v877 = vunpack.c.l.b16 %v779
    %v878 = vunpack.c.h.b16 %v779
    %v879 = vunpack.c.l.b16 %v780
    %v880 = vunpack.c.h.b16 %v780
    %v881 = vunpack.c.l.b16 %v781
    %v882 = vunpack.c.h.b16 %v781
    %v883 = vunpack.c.l.b16 %v782
    %v884 = vunpack.c.h.b16 %v782
    %v885 = vunpack.c.l.b16 %v783
    %v886 = vunpack.c.h.b16 %v783
    %v887 = vunpack.c.l.b16 %v784
    %v888 = vunpack.c.h.b16 %v784
    %v889 = vunpack.c.l.b16 %v785
    %v890 = vunpack.c.h.b16 %v785
    %v891 = vunpack.c.l.b16 %v786
    %v892 = vunpack.c.h.b16 %v786
    %v893 = vunpack.c.l.b16 %v787
    %v894 = vunpack.c.h.b16 %v787
    %v895 = vunpack.c.l.b16 %v788
    %v896 = vunpack.c.h.b16 %v788
    %v897 = vpack.c.b16 %v835, %v833
    %v898 = vpack.c.b16 %v836, %v834
    %v899 = vpack.c.b16 %v839, %v837
    %v900 = vpack.c.b16 %v840, %v838
    %v901 = vpack.c.b16 %v843, %v841
    %v902 = vpack.c.b16 %v844, %v842
    %v903 = vpack.c.b16 %v847, %v845
    %v904 = vpack.c.b16 %v848, %v846
    %v905 = vpack.c.b16 %v851, %v849
    %v906 = vpack.c.b16 %v852, %v850
    %v907 = vpack.c.b16 %v855, %v853
    %v908 = vpack.c.b16 %v856, %v854
    %v909 = vpack.c.b16 %v859, %v857
    %v910 = vpack.c.b16 %v860, %v858
    %v911 = vpack.c.b16 %v863, %v861
    %v912 = vpack.c.b16 %v864, %v862
    %v913 = vpack.c.b16 %v867, %v865
    %v914 = vpack.c.b16 %v868, %v866
    %v915 = vpack.c.b16 %v871, %v869
    %v916 = vpack.c.b16 %v872, %v870
    %v917 = vpack.c.b16 %v875, %v873
    %v918 = vpack.c.b16 %v876, %v874
    %v919 = vpack.c.b16 %v879, %v877
    %v920 = vpack.c.b16 %v880, %v878
    %v921 = vpack.c.b16 %v883, %v881
    %v922 = vpack.c.b16 %v884, %v882
    %v923 = vpack.c.b16 %v887, %v885
    %v924 = vpack.c.b16 %v888, %v886
    %v925 = vpack.c.b16 %v891, %v889
    %v926 = vpack.c.b16 %v892, %v890
    %v927 = vpack.c.b16 %v895, %v893
    %v928 = vpack.c.b16 %v896, %v894
    %961 = vmatprep.subr.bf16.mxu0 %v912
    %962 = vmatpush1.bf16.msra.mxu0 %v911
    %963 = vmatprep.subr.bf16.mxu0 %v910
    %964 = vmatpush1.bf16.msra.mxu0 %v909
    %965 = vmatprep.subr.bf16.mxu0 %v908
    %966 = vmatpush1.bf16.msra.mxu0 %v907
    %967 = vmatprep.subr.bf16.mxu0 %v906
    %968 = vmatpush1.bf16.msra.mxu0 %v905
    %969 = vmatprep.subr.bf16.mxu0 %v904
    %970 = vmatpush1.bf16.msra.mxu0 %v903
    %971 = vmatprep.subr.bf16.mxu0 %v902
    %972 = vmatpush1.bf16.msra.mxu0 %v901
    %973 = vmatprep.subr.bf16.mxu0 %v900
    %974 = vmatpush1.bf16.msra.mxu0 %v899
    %975 = vmatprep.subr.bf16.mxu0 %v898
    %976 = vmatpush1.bf16.msra.mxu0 %v897
    %977 = vmatprep.subr.bf16.mxu0 %v928
    %978 = vmatpush2.bf16.msra.mxu0 %v927
    %979 = vmatprep.subr.bf16.mxu0 %v926
    %980 = vmatpush2.bf16.msra.mxu0 %v925
    %981 = vmatprep.subr.bf16.mxu0 %v924
    %982 = vmatpush2.bf16.msra.mxu0 %v923
    %983 = vmatprep.subr.bf16.mxu0 %v922
    %984 = vmatpush2.bf16.msra.mxu0 %v921
    %985 = vmatprep.subr.bf16.mxu0 %v920
    %986 = vmatpush2.bf16.msra.mxu0 %v919
    %987 = vmatprep.subr.bf16.mxu0 %v918
    %988 = vmatpush2.bf16.msra.mxu0 %v917
    %989 = vmatprep.subr.bf16.mxu0 %v916
    %990 = vmatpush2.bf16.msra.mxu0 %v915
    %991 = vmatprep.subr.bf16.mxu0 %v914
    %992 = vmatpush2.bf16.msra.mxu0 %v913
    %993 = vmatprep.mubr.bf16.mxu0 %v742
    %994 = vmatmul.mubr.bf16.gmra.mxu0 %v741
    %v995 = vpop.f32.mrf.mxu0
    %v996 = vadd.f32 %v794, %v995
    %v997 = vpop.f32.mrf.mxu0
    %v998 = vadd.f32 %v798, %v997
    %v999 = vpop.f32.mrf.mxu0
    %v1000 = vadd.f32 %v794, %v999
    %v1001 = vpop.f32.mrf.mxu0
    %v1002 = vadd.f32 %v798, %v1001
    %1003 = vmatprep.mubr.bf16.mxu0 %v744
    %1004 = vmatmul.mubr.bf16.gmra.mxu0 %v743
    %v1005 = vpop.f32.mrf.mxu0
    %v1006 = vadd.f32 %v794, %v1005
    %v1007 = vpop.f32.mrf.mxu0
    %v1008 = vadd.f32 %v798, %v1007
    %v1009 = vpop.f32.mrf.mxu0
    %v1010 = vadd.f32 %v794, %v1009
    %v1011 = vpop.f32.mrf.mxu0
    %v1012 = vadd.f32 %v798, %v1011
    %1013 = vmatprep.mubr.bf16.mxu0 %v746
    %1014 = vmatmul.mubr.bf16.gmra.mxu0 %v745
    %v1015 = vpop.f32.mrf.mxu0
    %v1016 = vadd.f32 %v794, %v1015
    %v1017 = vpop.f32.mrf.mxu0
    %v1018 = vadd.f32 %v798, %v1017
    %v1019 = vpop.f32.mrf.mxu0
    %v1020 = vadd.f32 %v794, %v1019
    %v1021 = vpop.f32.mrf.mxu0
    %v1022 = vadd.f32 %v798, %v1021
    %1023 = vmatprep.mubr.bf16.mxu0 %v748
    %1024 = vmatmul.mubr.bf16.gmra.mxu0 %v747
    %v1025 = vpop.f32.mrf.mxu0
    %v1026 = vadd.f32 %v794, %v1025
    %v1027 = vpop.f32.mrf.mxu0
    %v1028 = vadd.f32 %v798, %v1027
    %v1029 = vpop.f32.mrf.mxu0
    %v1030 = vadd.f32 %v794, %v1029
    %v1031 = vpop.f32.mrf.mxu0
    %v1032 = vadd.f32 %v798, %v1031
    %1033 = vmatprep.mubr.bf16.mxu0 %v750
    %1034 = vmatmul.mubr.bf16.gmra.mxu0 %v749
    %v1035 = vpop.f32.mrf.mxu0
    %v1036 = vadd.f32 %v794, %v1035
    %v1037 = vpop.f32.mrf.mxu0
    %v1038 = vadd.f32 %v798, %v1037
    %v1039 = vpop.f32.mrf.mxu0
    %v1040 = vadd.f32 %v794, %v1039
    %v1041 = vpop.f32.mrf.mxu0
    %v1042 = vadd.f32 %v798, %v1041
    %1043 = vmatprep.mubr.bf16.mxu0 %v752
    %1044 = vmatmul.mubr.bf16.gmra.mxu0 %v751
    %v1045 = vpop.f32.mrf.mxu0
    %v1046 = vadd.f32 %v794, %v1045
    %v1047 = vpop.f32.mrf.mxu0
    %v1048 = vadd.f32 %v798, %v1047
    %v1049 = vpop.f32.mrf.mxu0
    %v1050 = vadd.f32 %v794, %v1049
    %v1051 = vpop.f32.mrf.mxu0
    %v1052 = vadd.f32 %v798, %v1051
    %1053 = vmatprep.mubr.bf16.mxu0 %v754
    %1054 = vmatmul.mubr.bf16.gmra.mxu0 %v753
    %v1055 = vpop.f32.mrf.mxu0
    %v1056 = vadd.f32 %v794, %v1055
    %v1057 = vpop.f32.mrf.mxu0
    %v1058 = vadd.f32 %v798, %v1057
    %v1059 = vpop.f32.mrf.mxu0
    %v1060 = vadd.f32 %v794, %v1059
    %v1061 = vpop.f32.mrf.mxu0
    %v1062 = vadd.f32 %v798, %v1061
    %1063 = vmatprep.mubr.bf16.mxu0 %v756
    %1064 = vmatmul.mubr.bf16.gmra.mxu0 %v755
    %v1065 = vpop.f32.mrf.mxu0
    %v1066 = vadd.f32 %v794, %v1065
    %v1067 = vpop.f32.mrf.mxu0
    %v1068 = vadd.f32 %v798, %v1067
    %v1069 = vpop.f32.mrf.mxu0
    %v1070 = vadd.f32 %v794, %v1069
    %v1071 = vpop.f32.mrf.mxu0
    %v1072 = vadd.f32 %v798, %v1071
    %1073 = vdwg.mxu0
    %v1074 = vmax.f32 %v996, 0.0
    %v1075 = vmax.f32 %v998, 0.0
    %v1076 = vmax.f32 %v1000, 0.0
    %v1077 = vmax.f32 %v1002, 0.0
    %v1078 = vmax.f32 %v1006, 0.0
    %v1079 = vmax.f32 %v1008, 0.0
    %v1080 = vmax.f32 %v1010, 0.0
    %v1081 = vmax.f32 %v1012, 0.0
    %v1082 = vmax.f32 %v1016, 0.0
    %v1083 = vmax.f32 %v1018, 0.0
    %v1084 = vmax.f32 %v1020, 0.0
    %v1085 = vmax.f32 %v1022, 0.0
    %v1086 = vmax.f32 %v1026, 0.0
    %v1087 = vmax.f32 %v1028, 0.0
    %v1088 = vmax.f32 %v1030, 0.0
    %v1089 = vmax.f32 %v1032, 0.0
    %v1090 = vmax.f32 %v1036, 0.0
    %v1091 = vmax.f32 %v1038, 0.0
    %v1092 = vmax.f32 %v1040, 0.0
    %v1093 = vmax.f32 %v1042, 0.0
    %v1094 = vmax.f32 %v1046, 0.0
    %v1095 = vmax.f32 %v1048, 0.0
    %v1096 = vmax.f32 %v1050, 0.0
    %v1097 = vmax.f32 %v1052, 0.0
    %v1098 = vmax.f32 %v1056, 0.0
    %v1099 = vmax.f32 %v1058, 0.0
    %v1100 = vmax.f32 %v1060, 0.0
    %v1101 = vmax.f32 %v1062, 0.0
    %v1102 = vmax.f32 %v1066, 0.0
    %v1103 = vmax.f32 %v1068, 0.0
    %v1104 = vmax.f32 %v1070, 0.0
    %v1105 = vmax.f32 %v1072, 0.0
    %v1106 = vpack.c.bf16 %v1076, %v1074
    %v1107 = vpack.c.bf16 %v1077, %v1075
    %v1108 = vpack.c.bf16 %v1080, %v1078
    %v1109 = vpack.c.bf16 %v1081, %v1079
    %v1110 = vpack.c.bf16 %v1084, %v1082
    %v1111 = vpack.c.bf16 %v1085, %v1083
    %v1112 = vpack.c.bf16 %v1088, %v1086
    %v1113 = vpack.c.bf16 %v1089, %v1087
    %v1114 = vpack.c.bf16 %v1092, %v1090
    %v1115 = vpack.c.bf16 %v1093, %v1091
    %v1116 = vpack.c.bf16 %v1096, %v1094
    %v1117 = vpack.c.bf16 %v1097, %v1095
    %v1118 = vpack.c.bf16 %v1100, %v1098
    %v1119 = vpack.c.bf16 %v1101, %v1099
    %v1120 = vpack.c.bf16 %v1104, %v1102
    %v1121 = vpack.c.bf16 %v1105, %v1103
    %v1122 = vld [vmem:[#allocation8] sm:$0xf]
    %v1123 = vld [vmem:[#allocation8 + $0x4] sm:$0xf]
    %v1124 = vld [vmem:[#allocation8 + $0x8] sm:$0xf]
    %v1125 = vld [vmem:[#allocation8 + $0xc] sm:$0xf]
    %v1126 = vld [vmem:[#allocation8 + $0x10] sm:$0xf]
    %v1127 = vld [vmem:[#allocation8 + $0x14] sm:$0xf]
    %v1128 = vld [vmem:[#allocation8 + $0x18] sm:$0xf]
    %v1129 = vld [vmem:[#allocation8 + $0x1c] sm:$0xf]
    %v1130 = vld [vmem:[#allocation8 + $0x20] sm:$0xf]
    %v1131 = vld [vmem:[#allocation8 + $0x24] sm:$0xf]
    %v1132 = vld [vmem:[#allocation8 + $0x28] sm:$0xf]
    %v1133 = vld [vmem:[#allocation8 + $0x2c] sm:$0xf]
    %v1134 = vld [vmem:[#allocation8 + $0x30] sm:$0xf]
    %v1135 = vld [vmem:[#allocation8 + $0x34] sm:$0xf]
    %v1136 = vld [vmem:[#allocation8 + $0x38] sm:$0xf]
    %v1137 = vld [vmem:[#allocation8 + $0x3c] sm:$0xf]
    %v1138 = vld [vmem:[#allocation8 + $0x40] sm:$0xf]
    %v1139 = vld [vmem:[#allocation8 + $0x44] sm:$0xf]
    %v1140 = vld [vmem:[#allocation8 + $0x48] sm:$0xf]
    %v1141 = vld [vmem:[#allocation8 + $0x4c] sm:$0xf]
    %v1142 = vld [vmem:[#allocation8 + $0x50] sm:$0xf]
    %v1143 = vld [vmem:[#allocation8 + $0x54] sm:$0xf]
    %v1144 = vld [vmem:[#allocation8 + $0x58] sm:$0xf]
    %v1145 = vld [vmem:[#allocation8 + $0x5c] sm:$0xf]
    %v1146 = vld [vmem:[#allocation8 + $0x60] sm:$0xf]
    %v1147 = vld [vmem:[#allocation8 + $0x64] sm:$0xf]
    %v1148 = vld [vmem:[#allocation8 + $0x68] sm:$0xf]
    %v1149 = vld [vmem:[#allocation8 + $0x6c] sm:$0xf]
    %v1150 = vld [vmem:[#allocation8 + $0x70] sm:$0xf]
    %v1151 = vld [vmem:[#allocation8 + $0x74] sm:$0xf]
    %v1152 = vld [vmem:[#allocation8 + $0x78] sm:$0xf]
    %v1153 = vld [vmem:[#allocation8 + $0x7c] sm:$0xf]
    %v1154 = vld [vmem:[%s10] sm:$0x1]
    %v1156 = vlaneseq
    %v1157 = vshrl.u32 %v1156, 7
    %v1158 = vsub.s32 0, %v1157
    %v1159 = vrot.slane %v1154, %v1158
    %v1193 = vunpack.c.l.b16 %v1122
    %v1194 = vunpack.c.l.b16 %v1123
    %v1195 = vunpack.c.l.b16 %v1124
    %v1196 = vunpack.c.l.b16 %v1125
    %v1197 = vunpack.c.l.b16 %v1126
    %v1198 = vunpack.c.l.b16 %v1127
    %v1199 = vunpack.c.l.b16 %v1128
    %v1200 = vunpack.c.l.b16 %v1129
    %v1201 = vunpack.c.l.b16 %v1130
    %v1202 = vunpack.c.l.b16 %v1131
    %v1203 = vunpack.c.l.b16 %v1132
    %v1204 = vunpack.c.l.b16 %v1133
    %v1205 = vunpack.c.l.b16 %v1134
    %v1206 = vunpack.c.l.b16 %v1135
    %v1207 = vunpack.c.l.b16 %v1136
    %v1208 = vunpack.c.l.b16 %v1137
    %v1209 = vunpack.c.l.b16 %v1138
    %v1210 = vunpack.c.l.b16 %v1139
    %v1211 = vunpack.c.l.b16 %v1140
    %v1212 = vunpack.c.l.b16 %v1141
    %v1213 = vunpack.c.l.b16 %v1142
    %v1214 = vunpack.c.l.b16 %v1143
    %v1215 = vunpack.c.l.b16 %v1144
    %v1216 = vunpack.c.l.b16 %v1145
    %v1217 = vunpack.c.l.b16 %v1146
    %v1218 = vunpack.c.l.b16 %v1147
    %v1219 = vunpack.c.l.b16 %v1148
    %v1220 = vunpack.c.l.b16 %v1149
    %v1221 = vunpack.c.l.b16 %v1150
    %v1222 = vunpack.c.l.b16 %v1151
    %v1223 = vunpack.c.l.b16 %v1152
    %v1224 = vunpack.c.l.b16 %v1153
    %v1225 = vpack.c.b16 %v1194, %v1193
    %v1226 = vpack.c.b16 %v1196, %v1195
    %v1227 = vpack.c.b16 %v1198, %v1197
    %v1228 = vpack.c.b16 %v1200, %v1199
    %v1229 = vpack.c.b16 %v1202, %v1201
    %v1230 = vpack.c.b16 %v1204, %v1203
    %v1231 = vpack.c.b16 %v1206, %v1205
    %v1232 = vpack.c.b16 %v1208, %v1207
    %v1233 = vpack.c.b16 %v1210, %v1209
    %v1234 = vpack.c.b16 %v1212, %v1211
    %v1235 = vpack.c.b16 %v1214, %v1213
    %v1236 = vpack.c.b16 %v1216, %v1215
    %v1237 = vpack.c.b16 %v1218, %v1217
    %v1238 = vpack.c.b16 %v1220, %v1219
    %v1239 = vpack.c.b16 %v1222, %v1221
    %v1240 = vpack.c.b16 %v1224, %v1223
    %1257 = vmatprep.subr.bf16.mxu0 0
    %1258 = vmatpush1.bf16.msra.mxu0 %v1232
    %1259 = vmatprep.subr.bf16.mxu0 0
    %1260 = vmatpush1.bf16.msra.mxu0 %v1231
    %1261 = vmatprep.subr.bf16.mxu0 0
    %1262 = vmatpush1.bf16.msra.mxu0 %v1230
    %1263 = vmatprep.subr.bf16.mxu0 0
    %1264 = vmatpush1.bf16.msra.mxu0 %v1229
    %1265 = vmatprep.subr.bf16.mxu0 0
    %1266 = vmatpush1.bf16.msra.mxu0 %v1228
    %1267 = vmatprep.subr.bf16.mxu0 0
    %1268 = vmatpush1.bf16.msra.mxu0 %v1227
    %1269 = vmatprep.subr.bf16.mxu0 0
    %1270 = vmatpush1.bf16.msra.mxu0 %v1226
    %1271 = vmatprep.subr.bf16.mxu0 0
    %1272 = vmatpush1.bf16.msra.mxu0 %v1225
    %1273 = vmatprep.subr.bf16.mxu0 0
    %1274 = vmatpush2.bf16.msra.mxu0 %v1240
    %1275 = vmatprep.subr.bf16.mxu0 0
    %1276 = vmatpush2.bf16.msra.mxu0 %v1239
    %1277 = vmatprep.subr.bf16.mxu0 0
    %1278 = vmatpush2.bf16.msra.mxu0 %v1238
    %1279 = vmatprep.subr.bf16.mxu0 0
    %1280 = vmatpush2.bf16.msra.mxu0 %v1237
    %1281 = vmatprep.subr.bf16.mxu0 0
    %1282 = vmatpush2.bf16.msra.mxu0 %v1236
    %1283 = vmatprep.subr.bf16.mxu0 0
    %1284 = vmatpush2.bf16.msra.mxu0 %v1235
    %1285 = vmatprep.subr.bf16.mxu0 0
    %1286 = vmatpush2.bf16.msra.mxu0 %v1234
    %1287 = vmatprep.subr.bf16.mxu0 0
    %1288 = vmatpush2.bf16.msra.mxu0 %v1233
    %1289 = vmatprep.mubr.bf16.mxu0 %v1107
    %1290 = vmatmul.mubr.bf16.gmra.mxu0 %v1106
    %v1291 = vpop.f32.mrf.mxu0
    %v1292 = vadd.f32 %v1159, %v1291
    %v1293 = vpop.f32.mrf.mxu0
    %v1294 = vpop.f32.mrf.mxu0
    %v1295 = vadd.f32 %v1159, %v1294
    %v1296 = vpop.f32.mrf.mxu0
    %1297 = vmatprep.mubr.bf16.mxu0 %v1109
    %1298 = vmatmul.mubr.bf16.gmra.mxu0 %v1108
    %v1299 = vpop.f32.mrf.mxu0
    %v1300 = vadd.f32 %v1159, %v1299
    %v1301 = vpop.f32.mrf.mxu0
    %v1302 = vpop.f32.mrf.mxu0
    %v1303 = vadd.f32 %v1159, %v1302
    %v1304 = vpop.f32.mrf.mxu0
    %1305 = vmatprep.mubr.bf16.mxu0 %v1111
    %1306 = vmatmul.mubr.bf16.gmra.mxu0 %v1110
    %v1307 = vpop.f32.mrf.mxu0
    %v1308 = vadd.f32 %v1159, %v1307
    %v1309 = vpop.f32.mrf.mxu0
    %v1310 = vpop.f32.mrf.mxu0
    %v1311 = vadd.f32 %v1159, %v1310
    %v1312 = vpop.f32.mrf.mxu0
    %1313 = vmatprep.mubr.bf16.mxu0 %v1113
    %1314 = vmatmul.mubr.bf16.gmra.mxu0 %v1112
    %v1315 = vpop.f32.mrf.mxu0
    %v1316 = vadd.f32 %v1159, %v1315
    %v1317 = vpop.f32.mrf.mxu0
    %v1318 = vpop.f32.mrf.mxu0
    %v1319 = vadd.f32 %v1159, %v1318
    %v1320 = vpop.f32.mrf.mxu0
    %1321 = vmatprep.mubr.bf16.mxu0 %v1115
    %1322 = vmatmul.mubr.bf16.gmra.mxu0 %v1114
    %v1323 = vpop.f32.mrf.mxu0
    %v1324 = vadd.f32 %v1159, %v1323
    %v1325 = vpop.f32.mrf.mxu0
    %v1326 = vpop.f32.mrf.mxu0
    %v1327 = vadd.f32 %v1159, %v1326
    %v1328 = vpop.f32.mrf.mxu0
    %1329 = vmatprep.mubr.bf16.mxu0 %v1117
    %1330 = vmatmul.mubr.bf16.gmra.mxu0 %v1116
    %v1331 = vpop.f32.mrf.mxu0
    %v1332 = vadd.f32 %v1159, %v1331
    %v1333 = vpop.f32.mrf.mxu0
    %v1334 = vpop.f32.mrf.mxu0
    %v1335 = vadd.f32 %v1159, %v1334
    %v1336 = vpop.f32.mrf.mxu0
    %1337 = vmatprep.mubr.bf16.mxu0 %v1119
    %1338 = vmatmul.mubr.bf16.gmra.mxu0 %v1118
    %v1339 = vpop.f32.mrf.mxu0
    %v1340 = vadd.f32 %v1159, %v1339
    %v1341 = vpop.f32.mrf.mxu0
    %v1342 = vpop.f32.mrf.mxu0
    %v1343 = vadd.f32 %v1159, %v1342
    %v1344 = vpop.f32.mrf.mxu0
    %1345 = vmatprep.mubr.bf16.mxu0 %v1121
    %1346 = vmatmul.mubr.bf16.gmra.mxu0 %v1120
    %v1347 = vpop.f32.mrf.mxu0
    %v1348 = vadd.f32 %v1159, %v1347
    %v1349 = vpop.f32.mrf.mxu0
    %v1350 = vpop.f32.mrf.mxu0
    %v1351 = vadd.f32 %v1159, %v1350
    %v1352 = vpop.f32.mrf.mxu0
    %1353 = vdwg.mxu0
    %v1354 = vmax.f32 %v1292, 0.0
    %v1355 = vmax.f32 %v1295, 0.0
    %v1356 = vmax.f32 %v1300, 0.0
    %v1357 = vmax.f32 %v1303, 0.0
    %v1358 = vmax.f32 %v1308, 0.0
    %v1359 = vmax.f32 %v1311, 0.0
    %v1360 = vmax.f32 %v1316, 0.0
    %v1361 = vmax.f32 %v1319, 0.0
    %v1362 = vmax.f32 %v1324, 0.0
    %v1363 = vmax.f32 %v1327, 0.0
    %v1364 = vmax.f32 %v1332, 0.0
    %v1365 = vmax.f32 %v1335, 0.0
    %v1366 = vmax.f32 %v1340, 0.0
    %v1367 = vmax.f32 %v1343, 0.0
    %v1368 = vmax.f32 %v1348, 0.0
    %v1369 = vmax.f32 %v1351, 0.0
    %v1370 = vpack.c.bf16 %v1355, %v1354
    %v1371 = vpack.c.bf16 %v1357, %v1356
    %v1372 = vpack.c.bf16 %v1359, %v1358
    %v1373 = vpack.c.bf16 %v1361, %v1360
    %v1374 = vpack.c.bf16 %v1363, %v1362
    %v1375 = vpack.c.bf16 %v1365, %v1364
    %v1376 = vpack.c.bf16 %v1367, %v1366
    %v1377 = vpack.c.bf16 %v1369, %v1368
    %v1378 = vld [vmem:[#allocation9] sm:$0xf]
    %v1379 = vld [vmem:[#allocation9 + $0x4] sm:$0xf]
    %v1380 = vld [vmem:[#allocation9 + $0x8] sm:$0xf]
    %v1381 = vld [vmem:[#allocation9 + $0xc] sm:$0xf]
    %v1382 = vld [vmem:[#allocation9 + $0x10] sm:$0xf]
    %v1383 = vld [vmem:[#allocation9 + $0x14] sm:$0xf]
    %v1384 = vld [vmem:[#allocation9 + $0x18] sm:$0xf]
    %v1385 = vld [vmem:[#allocation9 + $0x1c] sm:$0xf]
    %v1386 = vld [vmem:[#allocation9 + $0x20] sm:$0xf]
    %v1387 = vld [vmem:[#allocation9 + $0x24] sm:$0xf]
    %v1388 = vld [vmem:[#allocation9 + $0x28] sm:$0xf]
    %v1389 = vld [vmem:[#allocation9 + $0x2c] sm:$0xf]
    %v1390 = vld [vmem:[#allocation9 + $0x30] sm:$0xf]
    %v1391 = vld [vmem:[#allocation9 + $0x34] sm:$0xf]
    %v1392 = vld [vmem:[#allocation9 + $0x38] sm:$0xf]
    %v1393 = vld [vmem:[#allocation9 + $0x3c] sm:$0xf]
    %v1394 = vld [vmem:[%s12] sm:$0x1]
    %v1396 = vlaneseq
    %v1397 = vshrl.u32 %v1396, 7
    %v1398 = vsub.s32 0, %v1397
    %v1399 = vrot.slane %v1394, %v1398
    %v1417 = vunpack.c.l.b16 %v1378
    %v1418 = vunpack.c.l.b16 %v1379
    %v1419 = vunpack.c.l.b16 %v1380
    %v1420 = vunpack.c.l.b16 %v1381
    %v1421 = vunpack.c.l.b16 %v1382
    %v1422 = vunpack.c.l.b16 %v1383
    %v1423 = vunpack.c.l.b16 %v1384
    %v1424 = vunpack.c.l.b16 %v1385
    %v1425 = vunpack.c.l.b16 %v1386
    %v1426 = vunpack.c.l.b16 %v1387
    %v1427 = vunpack.c.l.b16 %v1388
    %v1428 = vunpack.c.l.b16 %v1389
    %v1429 = vunpack.c.l.b16 %v1390
    %v1430 = vunpack.c.l.b16 %v1391
    %v1431 = vunpack.c.l.b16 %v1392
    %v1432 = vunpack.c.l.b16 %v1393
    %v1433 = vpack.c.b16 %v1418, %v1417
    %v1434 = vpack.c.b16 %v1420, %v1419
    %v1435 = vpack.c.b16 %v1422, %v1421
    %v1436 = vpack.c.b16 %v1424, %v1423
    %v1437 = vpack.c.b16 %v1426, %v1425
    %v1438 = vpack.c.b16 %v1428, %v1427
    %v1439 = vpack.c.b16 %v1430, %v1429
    %v1440 = vpack.c.b16 %v1432, %v1431
    %1449 = vmatprep.subr.bf16.mxu0 0
    %1450 = vmatpush1.bf16.msra.mxu0 %v1440
    %1451 = vmatprep.subr.bf16.mxu0 0
    %1452 = vmatpush1.bf16.msra.mxu0 %v1439
    %1453 = vmatprep.subr.bf16.mxu0 0
    %1454 = vmatpush1.bf16.msra.mxu0 %v1438
    %1455 = vmatprep.subr.bf16.mxu0 0
    %1456 = vmatpush1.bf16.msra.mxu0 %v1437
    %1457 = vmatprep.subr.bf16.mxu0 0
    %1458 = vmatpush1.bf16.msra.mxu0 %v1436
    %1459 = vmatprep.subr.bf16.mxu0 0
    %1460 = vmatpush1.bf16.msra.mxu0 %v1435
    %1461 = vmatprep.subr.bf16.mxu0 0
    %1462 = vmatpush1.bf16.msra.mxu0 %v1434
    %1463 = vmatprep.subr.bf16.mxu0 0
    %1464 = vmatpush1.bf16.msra.mxu0 %v1433
    %1465 = vmatprep.subr.bf16.mxu0 0
    %1466 = vmatpush2.bf16.msra.mxu0 0
    %1467 = vmatprep.subr.bf16.mxu0 0
    %1468 = vmatpush2.bf16.msra.mxu0 0
    %1469 = vmatprep.subr.bf16.mxu0 0
    %1470 = vmatpush2.bf16.msra.mxu0 0
    %1471 = vmatprep.subr.bf16.mxu0 0
    %1472 = vmatpush2.bf16.msra.mxu0 0
    %1473 = vmatprep.subr.bf16.mxu0 0
    %1474 = vmatpush2.bf16.msra.mxu0 0
    %1475 = vmatprep.subr.bf16.mxu0 0
    %1476 = vmatpush2.bf16.msra.mxu0 0
    %1477 = vmatprep.subr.bf16.mxu0 0
    %1478 = vmatpush2.bf16.msra.mxu0 0
    %1479 = vmatprep.subr.bf16.mxu0 0
    %1480 = vmatpush2.bf16.msra.mxu0 0
    %1481 = vmatprep.mubr.bf16.mxu0 0
    %1482 = vmatmul.mubr.bf16.gmra.mxu0 %v1370
    %v1483 = vpop.f32.mrf.mxu0
    %v1484 = vadd.f32 %v1399, %v1483
    %v1485 = vpop.f32.mrf.mxu0
    %v1486 = vpop.f32.mrf.mxu0
    %v1487 = vadd.f32 %v1399, %v1486
    %v1488 = vpop.f32.mrf.mxu0
    %1489 = vmatprep.mubr.bf16.mxu0 0
    %1490 = vmatmul.mubr.bf16.gmra.mxu0 %v1371
    %v1491 = vpop.f32.mrf.mxu0
    %v1492 = vadd.f32 %v1399, %v1491
    %v1493 = vpop.f32.mrf.mxu0
    %v1494 = vpop.f32.mrf.mxu0
    %v1495 = vadd.f32 %v1399, %v1494
    %v1496 = vpop.f32.mrf.mxu0
    %1497 = vmatprep.mubr.bf16.mxu0 0
    %1498 = vmatmul.mubr.bf16.gmra.mxu0 %v1372
    %v1499 = vpop.f32.mrf.mxu0
    %v1500 = vadd.f32 %v1399, %v1499
    %v1501 = vpop.f32.mrf.mxu0
    %v1502 = vpop.f32.mrf.mxu0
    %v1503 = vadd.f32 %v1399, %v1502
    %v1504 = vpop.f32.mrf.mxu0
    %1505 = vmatprep.mubr.bf16.mxu0 0
    %1506 = vmatmul.mubr.bf16.gmra.mxu0 %v1373
    %v1507 = vpop.f32.mrf.mxu0
    %v1508 = vadd.f32 %v1399, %v1507
    %v1509 = vpop.f32.mrf.mxu0
    %v1510 = vpop.f32.mrf.mxu0
    %v1511 = vadd.f32 %v1399, %v1510
    %v1512 = vpop.f32.mrf.mxu0
    %1513 = vmatprep.mubr.bf16.mxu0 0
    %1514 = vmatmul.mubr.bf16.gmra.mxu0 %v1374
    %v1515 = vpop.f32.mrf.mxu0
    %v1516 = vadd.f32 %v1399, %v1515
    %v1517 = vpop.f32.mrf.mxu0
    %v1518 = vpop.f32.mrf.mxu0
    %v1519 = vadd.f32 %v1399, %v1518
    %v1520 = vpop.f32.mrf.mxu0
    %1521 = vmatprep.mubr.bf16.mxu0 0
    %1522 = vmatmul.mubr.bf16.gmra.mxu0 %v1375
    %v1523 = vpop.f32.mrf.mxu0
    %v1524 = vadd.f32 %v1399, %v1523
    %v1525 = vpop.f32.mrf.mxu0
    %v1526 = vpop.f32.mrf.mxu0
    %v1527 = vadd.f32 %v1399, %v1526
    %v1528 = vpop.f32.mrf.mxu0
    %1529 = vmatprep.mubr.bf16.mxu0 0
    %1530 = vmatmul.mubr.bf16.gmra.mxu0 %v1376
    %v1531 = vpop.f32.mrf.mxu0
    %v1532 = vadd.f32 %v1399, %v1531
    %v1533 = vpop.f32.mrf.mxu0
    %v1534 = vpop.f32.mrf.mxu0
    %v1535 = vadd.f32 %v1399, %v1534
    %v1536 = vpop.f32.mrf.mxu0
    %1537 = vmatprep.mubr.bf16.mxu0 0
    %1538 = vmatmul.mubr.bf16.gmra.mxu0 %v1377
    %v1539 = vpop.f32.mrf.mxu0
    %v1540 = vadd.f32 %v1399, %v1539
    %v1541 = vpop.f32.mrf.mxu0
    %v1542 = vpop.f32.mrf.mxu0
    %v1543 = vadd.f32 %v1399, %v1542
    %v1544 = vpop.f32.mrf.mxu0
    %1545 = vdwg.mxu0
    %v1546 = vmax.f32 %v1484, 0.0
    %v1547 = vmax.f32 %v1487, 0.0
    %v1548 = vmax.f32 %v1492, 0.0
    %v1549 = vmax.f32 %v1495, 0.0
    %v1550 = vmax.f32 %v1500, 0.0
    %v1551 = vmax.f32 %v1503, 0.0
    %v1552 = vmax.f32 %v1508, 0.0
    %v1553 = vmax.f32 %v1511, 0.0
    %v1554 = vmax.f32 %v1516, 0.0
    %v1555 = vmax.f32 %v1519, 0.0
    %v1556 = vmax.f32 %v1524, 0.0
    %v1557 = vmax.f32 %v1527, 0.0
    %v1558 = vmax.f32 %v1532, 0.0
    %v1559 = vmax.f32 %v1535, 0.0
    %v1560 = vmax.f32 %v1540, 0.0
    %v1561 = vmax.f32 %v1543, 0.0
    %1562 = vxpose.xlu0.b32.start [1/16] %v1546, 128
    %1563 = vxpose.xlu0.b32.cont [2/16] %v1547, 128
    %1564 = vxpose.xlu0.b32.cont [3/16] %v1548, 128
    %1565 = vxpose.xlu0.b32.cont [4/16] %v1549, 128
    %1566 = vxpose.xlu0.b32.cont [5/16] %v1550, 128
    %1567 = vxpose.xlu0.b32.cont [6/16] %v1551, 128
    %1568 = vxpose.xlu0.b32.cont [7/16] %v1552, 128
    %1569 = vxpose.xlu0.b32.cont [8/16] %v1553, 128
    %1570 = vxpose.xlu0.b32.cont [9/16] %v1554, 128
    %1571 = vxpose.xlu0.b32.cont [10/16] %v1555, 128
    %1572 = vxpose.xlu0.b32.cont [11/16] %v1556, 128
    %1573 = vxpose.xlu0.b32.cont [12/16] %v1557, 128
    %1574 = vxpose.xlu0.b32.cont [13/16] %v1558, 128
    %1575 = vxpose.xlu0.b32.cont [14/16] %v1559, 128
    %1576 = vxpose.xlu0.b32.cont [15/16] %v1560, 128
    %1577 = vxpose.xlu0.b32.end [16/16] %v1561, 128
    %v1578 = vpop.trf.xlu0
    %v1579 = vpop.trf.xlu0
    %v1580 = vpop.trf.xlu0
    %v1581 = vpop.trf.xlu0
    %v1582 = vpop.trf.xlu0
    %v1583 = vpop.trf.xlu0
    %v1584 = vpop.trf.xlu0
    %v1585 = vpop.trf.xlu0
    %v1586 = vpop.trf.xlu0
    %v1587 = vpop.trf.xlu0
    %v1588 = vpop.trf.xlu0
    %v1589 = vpop.trf.xlu0
    %v1590 = vpop.trf.xlu0
    %v1591 = vpop.trf.xlu0
    %v1592 = vpop.trf.xlu0
    %v1593 = vpop.trf.xlu0
    %v1594 = vpack.c.bf16 %v1579, %v1578
    %v1595 = vpack.c.bf16 %v1581, %v1580
    %v1596 = vpack.c.bf16 %v1583, %v1582
    %v1597 = vpack.c.bf16 %v1585, %v1584
    %v1598 = vpack.c.bf16 %v1587, %v1586
    %v1599 = vpack.c.bf16 %v1589, %v1588
    %v1600 = vpack.c.bf16 %v1591, %v1590
    %v1601 = vpack.c.bf16 %v1593, %v1592
    %v1602 = vld [vmem:[%s13] sm:$0x1]
    %s1603 = sld [smem:[#allocation2]]
    %v1604 = vstv %s1603
    %1605 = vmatprep.subr.bf16.mxu0 0
    %1606 = vmatpush1.bf16.msra.mxu0 %v1601
    %1607 = vmatprep.subr.bf16.mxu0 0
    %1608 = vmatpush1.bf16.msra.mxu0 %v1600
    %1609 = vmatprep.subr.bf16.mxu0 0
    %1610 = vmatpush1.bf16.msra.mxu0 %v1599
    %1611 = vmatprep.subr.bf16.mxu0 0
    %1612 = vmatpush1.bf16.msra.mxu0 %v1598
    %1613 = vmatprep.subr.bf16.mxu0 0
    %1614 = vmatpush1.bf16.msra.mxu0 %v1597
    %1615 = vmatprep.subr.bf16.mxu0 0
    %1616 = vmatpush1.bf16.msra.mxu0 %v1596
    %1617 = vmatprep.subr.bf16.mxu0 0
    %1618 = vmatpush1.bf16.msra.mxu0 %v1595
    %1619 = vmatprep.subr.bf16.mxu0 0
    %1620 = vmatpush1.bf16.msra.mxu0 %v1594
    %1621 = vmatprep.subr.bf16.mxu0 0
    %1622 = vmatpush2.bf16.msra.mxu0 0
    %1623 = vmatprep.subr.bf16.mxu0 0
    %1624 = vmatpush2.bf16.msra.mxu0 0
    %1625 = vmatprep.subr.bf16.mxu0 0
    %1626 = vmatpush2.bf16.msra.mxu0 0
    %1627 = vmatprep.subr.bf16.mxu0 0
    %1628 = vmatpush2.bf16.msra.mxu0 0
    %1629 = vmatprep.subr.bf16.mxu0 0
    %1630 = vmatpush2.bf16.msra.mxu0 0
    %1631 = vmatprep.subr.bf16.mxu0 0
    %1632 = vmatpush2.bf16.msra.mxu0 0
    %1633 = vmatprep.subr.bf16.mxu0 0
    %1634 = vmatpush2.bf16.msra.mxu0 0
    %1635 = vmatprep.subr.bf16.mxu0 0
    %1636 = vmatpush2.bf16.msra.mxu0 0
    %1637 = vmatprep.mubr.bf16.mxu0 0
    %1638 = vmatmul.mubr.bf16.gmra.mxu0 %v1602
    %v1639 = vpop.f32.mrf.mxu0
    %v1640 = vadd.f32 %v1604, %v1639
    %v1641 = vpop.f32.mrf.mxu0
    %v1642 = vpop.f32.mrf.mxu0
    %v1643 = vpop.f32.mrf.mxu0
    %1644 = vdwg.mxu0
    %1645 = vst [vmem:[#allocation11] sm:$0x1] %v1640
    // Predicated region
    $region78: #{tpu_custom_call.1} parent=1 // pred_check
      _
    $region79: #{tpu_custom_call.1} parent=1 // pred_check_branch
      %1647 = sbr.rel (0) target = $region81
    $region80: #{tpu_custom_call.1} parent=1 // pred_region
      %s1649 = ssub.s32 16, 16
      %1650 = vsyncadd [#allocation5], %s1649
      %s1652 = sshll.u32 [#allocation11], 4
      %s1653 = int_to_ptr.vmem [resolvable:$true] %s1652
      %1655 = dma.vmem_to_hbm [thread:$0]  %s1653, 16, %s15, [#allocation5]
    $region81: #{tpu_custom_call.1} parent=1 // pred_fallthru
      _
    // Predicated region
    $region82: #{tpu_custom_call.1} parent=1 // pred_check
      _
    $region83: #{tpu_custom_call.1} parent=1 // pred_check_branch
      %1657 = sbr.rel (0) target = $region85
    $region84: #{tpu_custom_call.1} parent=1 // pred_region
      %1658 = dma.done [#allocation5], 16
    $region85: #{tpu_custom_call.1} parent=1 // pred_fallthru
      _
    %1659 = vsyncpa [#allocation4], 1
    %1660 = vsyncpa [#allocation7], 1
    %1661 = vsyncpa [#allocation10], 1
    %1662 = vsyncpa [#allocation5], 1

</llo_original>
